<compile_context>
chip_gen: v7x
topology: tpu7x:2x2x1
jax: 0.10.0
libtpu: 0.0.40
codegen_flags: <defaults>
</compile_context>

<pallas_src>
import functools

import jax
import jax.numpy as jnp
from jax.experimental import pallas as pl
from jax.experimental.pallas import tpu as pltpu


def _cross_attention_kernel(
    x_ref,            # (1, TS, F)  f32   query-side inputs tile
    c_ref,            # (1, Sc, F)  f32   full context for this batch element
    wq_ref, bq_ref,   # (F, F) bf16 (scale folded in), (1, F) f32
    wkv_ref, bkv_ref, # (F, 2F) bf16 fused K|V weights, (1, 2F) f32
    wo_ref, bo_ref,   # (F, F) bf16, (1, F) f32
    o_ref,            # (1, TS, F)  f32
    kv_scratch,       # (Sc, 2F) bf16  K|V resident across the S tiles of a batch
    attn_scratch,     # (TS, F) f32    lane-dense per-head output accumulator
    *,
    num_heads: int,
    head_size: int,
):
    feat = num_heads * head_size

    # ---- K/V projection: computed once per batch element (first S tile) ----
    @pl.when(pl.program_id(1) == 0)
    def _():
        c = c_ref[0].astype(jnp.bfloat16)                          # (Sc, F)
        kv = jnp.dot(c, wkv_ref[...], preferred_element_type=jnp.float32)
        kv = kv + bkv_ref[...]                                     # (Sc, 2F) f32
        kv_scratch[...] = kv.astype(jnp.bfloat16)

    # ---- Q projection for this S tile (1/sqrt(Dh) already folded into Wq/bq) ----
    x = x_ref[0].astype(jnp.bfloat16)                              # (TS, F)
    q = jnp.dot(x, wq_ref[...], preferred_element_type=jnp.float32) + bq_ref[...]
    q = q.astype(jnp.bfloat16)                                     # (TS, F), pre-scaled

    kv = kv_scratch[...]                                           # (Sc, 2F) bf16

    # ---- per-head attention; outputs land in a lane-dense (TS, F) scratch ----
    for h in range(num_heads):
        lo = h * head_size
        hi = lo + head_size
        qh = q[:, lo:hi]                            # (TS, Dh) bf16
        kh = kv[:, lo:hi]                           # (Sc, Dh) bf16
        vh = kv[:, feat + lo:feat + hi]             # (Sc, Dh) bf16

        # scores = q @ k^T  -> (TS, Sc); contraction over Dh, f32 accumulation.
        s = jax.lax.dot_general(
            qh, kh, (((1,), (1,)), ((), ())),
            preferred_element_type=jnp.float32,
        )

        # softmax over the context axis (full Sc resident; (TS, Sc) stays small)
        s = s - jnp.max(s, axis=-1, keepdims=True)
        p = jnp.exp(s)
        p = p * pl.reciprocal(jnp.sum(p, axis=-1, keepdims=True), approx=True)

        # attn_h = softmax(scores) @ v  -> (TS, Dh); contraction over Sc
        attn_scratch[:, lo:hi] = jnp.dot(
            p.astype(jnp.bfloat16), vh, preferred_element_type=jnp.float32)

    # ---- output projection (single lane-dense (TS,F)@(F,F) matmul) ----
    attn = attn_scratch[...].astype(jnp.bfloat16)                  # (TS, F)
    out = jnp.dot(attn, wo_ref[...], preferred_element_type=jnp.float32)
    out = out + bo_ref[...]
    o_ref[0] = out.astype(o_ref.dtype)


def _vmem_limit_bytes():
    # Raise the default scoped-VMEM limit (16/32 MiB) while leaving headroom
    # on every generation (v7x only has 64 MiB physical VMEM per TensorCore).
    try:
        cap = int(pltpu.get_tpu_info().vmem_capacity_bytes)
    except Exception:
        cap = 64 * 1024 * 1024
    return max(32 * 1024 * 1024, min(cap - 16 * 1024 * 1024, 100 * 1024 * 1024))


def _pick_tile_s(S, tile_s):
    """Largest S-tile <= tile_s that is a multiple of 8 and divides S; else S."""
    tile_s = min(tile_s, S)
    t = (tile_s // 8) * 8
    while t >= 8:
        if S % t == 0:
            return t
        t -= 8
    return S   # ragged / tiny sequence: single S tile (block == full dim)


def cross_attention(inputs, params, *, num_heads, head_size, context=None,
                    tile_s=256):
    """inputs: (B, S, F); context: (B, Sc, F) or None (self-attention)."""
    if context is None:
        context = inputs

    B, S, F = inputs.shape
    Bc, Sc, Fc = context.shape
    assert F == num_heads * head_size and Fc == F and Bc == B

    tile_s = _pick_tile_s(S, tile_s)

    scale = head_size ** (-0.5)

    # PyTorch Linear: y = x @ W.T + b.  Pre-transpose weights to (in, out) and
    # cast to bf16 for the MXU (f32 accumulation happens in-kernel).  Fold the
    # 1/sqrt(Dh) attention scale into Wq/bq (one-time parameter transform) and
    # fuse Wk|Wv into one (F, 2F) matrix for a single K/V projection matmul.
    wq_t = (params["wq"].T * scale).astype(jnp.bfloat16)
    bq = (params["bq"] * scale).reshape(1, F).astype(jnp.float32)
    wkv_t = jnp.concatenate([params["wk"].T, params["wv"].T], axis=1).astype(jnp.bfloat16)
    bkv = jnp.concatenate([params["bk"], params["bv"]]).reshape(1, 2 * F).astype(jnp.float32)
    wo_t = params["wo"].T.astype(jnp.bfloat16)
    bo = params["bo"].reshape(1, F).astype(jnp.float32)

    kernel = functools.partial(
        _cross_attention_kernel, num_heads=num_heads, head_size=head_size)

    const = lambda b, s: (0, 0)   # weights/biases: same block every grid step

    return pl.pallas_call(
        kernel,
        out_shape=jax.ShapeDtypeStruct((B, S, F), inputs.dtype),
        grid_spec=pltpu.PrefetchScalarGridSpec(
            num_scalar_prefetch=0,
            grid=(B, S // tile_s),
            in_specs=[
                pl.BlockSpec((1, tile_s, F), lambda b, s: (b, s, 0)),  # inputs tile
                pl.BlockSpec((1, Sc, F), lambda b, s: (b, 0, 0)),      # context (per batch)
                pl.BlockSpec((F, F), const), pl.BlockSpec((1, F), const),          # to_q
                pl.BlockSpec((F, 2 * F), const), pl.BlockSpec((1, 2 * F), const),  # to_k|to_v
                pl.BlockSpec((F, F), const), pl.BlockSpec((1, F), const),          # out_proj
            ],
            out_specs=pl.BlockSpec((1, tile_s, F), lambda b, s: (b, s, 0)),
            scratch_shapes=[
                pltpu.VMEM((Sc, 2 * F), jnp.bfloat16),   # resident K|V
                pltpu.VMEM((tile_s, F), jnp.float32),    # per-head output accumulator
            ],
        ),
        compiler_params=pltpu.CompilerParams(
            # Batch axis may be megacore-sharded; the S axis must stay on one
            # core ("arbitrary") because the K/V scratch is filled at s == 0.
            dimension_semantics=("parallel", "arbitrary"),
            vmem_limit_bytes=_vmem_limit_bytes(),
        ),
    )(inputs, context, wq_t, bq, wkv_t, bkv, wo_t, bo)


def cross_attention_ref(inputs, params, *, num_heads, head_size, context=None):
    """Pure-JAX f32 reference (intended standard multi-head attention)."""
    if context is None:
        context = inputs
    B, S, F = inputs.shape
    Sc = context.shape[1]
    scale = head_size ** (-0.5)

    q = inputs @ params["wq"].T + params["bq"]
    k = context @ params["wk"].T + params["bk"]
    v = context @ params["wv"].T + params["bv"]

    q = q.reshape(B, S, num_heads, head_size).transpose(0, 2, 1, 3)
    k = k.reshape(B, Sc, num_heads, head_size).transpose(0, 2, 1, 3)
    v = v.reshape(B, Sc, num_heads, head_size).transpose(0, 2, 1, 3)

    score = jnp.einsum("bhqd,bhkd->bhqk", q, k) * scale
    weights = jax.nn.softmax(score, axis=-1)
    attn = jnp.einsum("bhqk,bhkd->bhqd", weights, v)
    attn = attn.transpose(0, 2, 1, 3).reshape(B, S, num_heads * head_size)
    return attn @ params["wo"].T + params["bo"]


def init_params(key, in_features, num_heads, head_size):
    out_features = num_heads * head_size
    keys = jax.random.split(key, 8)
    s = 1.0 / jnp.sqrt(in_features).astype(jnp.float32)

    def w(k):
        return jax.random.uniform(k, (out_features, in_features), jnp.float32, -s, s)

    def b(k):
        return jax.random.uniform(k, (out_features,), jnp.float32, -s, s)

    return {
        "wq": w(keys[0]), "bq": b(keys[1]),
        "wk": w(keys[2]), "bk": b(keys[3]),
        "wv": w(keys[4]), "bv": b(keys[5]),
        "wo": w(keys[6]), "bo": b(keys[7]),
    }


if __name__ == "__main__":
    B, S = 2, 16
    num_heads, head_size = 4, 8
    in_features = num_heads * head_size   # 32 (out_proj is Linear(F, F))

    key = jax.random.PRNGKey(0)
    k_in, k_ctx, k_params = jax.random.split(key, 3)
    inputs = jax.random.normal(k_in, (B, S, in_features), jnp.float32)
    params = init_params(k_params, in_features, num_heads, head_size)

    # --- self-attention path (context=None) ---
    out = cross_attention(inputs, params, num_heads=num_heads,
                          head_size=head_size, context=None)
    out = jax.block_until_ready(out)
    ref = cross_attention_ref(inputs, params, num_heads=num_heads,
                              head_size=head_size, context=None)
    assert out.shape == (B, S, in_features)
    err = float(jnp.max(jnp.abs(out - ref)))
    # bf16 MXU operands with f32 accumulation -> slightly looser tolerance.
    assert jnp.allclose(out, ref, atol=5e-2, rtol=5e-2), \
        f"self-attention mismatch vs reference (max abs err {err})"

    # --- cross-attention path (separate context, different Sc) ---
    context = jax.random.normal(k_ctx, (B, 8, in_features), jnp.float32)
    out_x = cross_attention(inputs, params, num_heads=num_heads,
                            head_size=head_size, context=context)
    out_x = jax.block_until_ready(out_x)
    ref_x = cross_attention_ref(inputs, params, num_heads=num_heads,
                                head_size=head_size, context=context)
    err_x = float(jnp.max(jnp.abs(out_x - ref_x)))
    assert jnp.allclose(out_x, ref_x, atol=5e-2, rtol=5e-2), \
        f"cross-attention mismatch vs reference (max abs err {err_x})"

    print("KERNEL_OK")
</pallas_src>

<mosaic_0001>
module attributes {stable_mosaic.version = 11 : i64} {
  func.func @_cross_attention_kernel(%arg0: i32, %arg1: i32, %arg2: memref<1x16x32xf32, #tpu.memory_space<vmem>>, %arg3: memref<1x16x32xf32, #tpu.memory_space<vmem>>, %arg4: memref<32x32xbf16, #tpu.memory_space<vmem>>, %arg5: memref<1x32xf32, #tpu.memory_space<vmem>>, %arg6: memref<32x64xbf16, #tpu.memory_space<vmem>>, %arg7: memref<1x64xf32, #tpu.memory_space<vmem>>, %arg8: memref<32x32xbf16, #tpu.memory_space<vmem>>, %arg9: memref<1x32xf32, #tpu.memory_space<vmem>>, %arg10: memref<1x16x32xf32, #tpu.memory_space<vmem>>, %arg11: memref<16x64xbf16, #tpu.memory_space<vmem>>, %arg12: memref<16x32xf32, #tpu.memory_space<vmem>>) attributes {dimension_semantics = [#tpu.dimension_semantics<parallel>, #tpu.dimension_semantics<arbitrary>], iteration_bounds = array<i64: 2, 1>, scalar_prefetch = 0 : i64, scratch_operands = 2 : i64, tpu.core_type = #tpu.core_type<tc>, window_params = [{transform_indices = @transform_0, window_bounds = array<i64: 1, 16, 32>}, {transform_indices = @transform_1, window_bounds = array<i64: 1, 16, 32>}, {pipeline_mode = #tpu.pipeline_mode<synchronous>, transform_indices = @transform_2, window_bounds = array<i64: 32, 32>}, {pipeline_mode = #tpu.pipeline_mode<synchronous>, transform_indices = @transform_3, window_bounds = array<i64: 1, 32>}, {pipeline_mode = #tpu.pipeline_mode<synchronous>, transform_indices = @transform_4, window_bounds = array<i64: 32, 64>}, {pipeline_mode = #tpu.pipeline_mode<synchronous>, transform_indices = @transform_5, window_bounds = array<i64: 1, 64>}, {pipeline_mode = #tpu.pipeline_mode<synchronous>, transform_indices = @transform_6, window_bounds = array<i64: 32, 32>}, {pipeline_mode = #tpu.pipeline_mode<synchronous>, transform_indices = @transform_7, window_bounds = array<i64: 1, 32>}, {transform_indices = @transform_8, window_bounds = array<i64: 1, 16, 32>}]} {
    %c0_i32 = arith.constant 0 : i32
    %0 = arith.cmpi eq, %arg1, %c0_i32 : i32
    %1 = arith.extui %0 : i1 to i32
    %c0_i32_0 = arith.constant 0 : i32
    %2 = arith.cmpi ne, %1, %c0_i32_0 : i32
    scf.if %2 {
      %c0_40 = arith.constant 0 : index
      %c0_41 = arith.constant 0 : index
      %c0_42 = arith.constant 0 : index
      %91 = vector.load %arg3[%c0_40, %c0_41, %c0_42] : memref<1x16x32xf32, #tpu.memory_space<vmem>>, vector<1x16x32xf32>
      %92 = vector.shape_cast %91 : vector<1x16x32xf32> to vector<16x32xf32>
      %93 = arith.truncf %92 : vector<16x32xf32> to vector<16x32xbf16>
      %c0_43 = arith.constant 0 : index
      %c0_44 = arith.constant 0 : index
      %94 = vector.load %arg6[%c0_43, %c0_44] : memref<32x64xbf16, #tpu.memory_space<vmem>>, vector<32x64xbf16>
      %cst_45 = arith.constant dense<0.000000e+00> : vector<16x64xf32>
      %95 = tpu.matmul %93, %94, %cst_45 {dimension_numbers = #tpu.dot_dimension_numbers<[1], [0], [0], [1], [0, 0, 1, 1], [], []>} : vector<16x32xbf16>, vector<32x64xbf16>, vector<16x64xf32> -> vector<16x64xf32>
      %c0_46 = arith.constant 0 : index
      %c0_47 = arith.constant 0 : index
      %96 = vector.load %arg7[%c0_46, %c0_47] : memref<1x64xf32, #tpu.memory_space<vmem>>, vector<1x64xf32>
      %97 = vector.broadcast %96 : vector<1x64xf32> to vector<16x64xf32>
      %98 = arith.addf %95, %97 : vector<16x64xf32>
      %99 = arith.truncf %98 : vector<16x64xf32> to vector<16x64xbf16>
      %c0_48 = arith.constant 0 : index
      %c0_49 = arith.constant 0 : index
      %100 = vector.load %arg11[%c0_48, %c0_49] : memref<16x64xbf16, #tpu.memory_space<vmem>>, vector<16x64xbf16>
      tpu.vector_store %arg11[%c0_48, %c0_49], %99 {strides = array<i32>} : memref<16x64xbf16, #tpu.memory_space<vmem>>, vector<16x64xbf16>,
    } else {
    }
    %c0 = arith.constant 0 : index
    %c0_1 = arith.constant 0 : index
    %c0_2 = arith.constant 0 : index
    %3 = vector.load %arg2[%c0, %c0_1, %c0_2] : memref<1x16x32xf32, #tpu.memory_space<vmem>>, vector<1x16x32xf32>
    %4 = vector.shape_cast %3 : vector<1x16x32xf32> to vector<16x32xf32>
    %5 = arith.truncf %4 : vector<16x32xf32> to vector<16x32xbf16>
    %c0_3 = arith.constant 0 : index
    %c0_4 = arith.constant 0 : index
    %6 = vector.load %arg4[%c0_3, %c0_4] : memref<32x32xbf16, #tpu.memory_space<vmem>>, vector<32x32xbf16>
    %cst = arith.constant dense<0.000000e+00> : vector<16x32xf32>
    %7 = tpu.matmul %5, %6, %cst {dimension_numbers = #tpu.dot_dimension_numbers<[1], [0], [0], [1], [0, 0, 1, 1], [], []>} : vector<16x32xbf16>, vector<32x32xbf16>, vector<16x32xf32> -> vector<16x32xf32>
    %c0_5 = arith.constant 0 : index
    %c0_6 = arith.constant 0 : index
    %8 = vector.load %arg5[%c0_5, %c0_6] : memref<1x32xf32, #tpu.memory_space<vmem>>, vector<1x32xf32>
    %9 = vector.broadcast %8 : vector<1x32xf32> to vector<16x32xf32>
    %10 = arith.addf %7, %9 : vector<16x32xf32>
    %11 = arith.truncf %10 : vector<16x32xf32> to vector<16x32xbf16>
    %c0_7 = arith.constant 0 : index
    %c0_8 = arith.constant 0 : index
    %12 = vector.load %arg11[%c0_7, %c0_8] : memref<16x64xbf16, #tpu.memory_space<vmem>>, vector<16x64xbf16>
    %13 = vector.extract_strided_slice %11 {offsets = [0, 0], sizes = [16, 8], strides = [1, 1]} : vector<16x32xbf16> to vector<16x8xbf16>
    %14 = vector.extract_strided_slice %12 {offsets = [0, 0], sizes = [16, 8], strides = [1, 1]} : vector<16x64xbf16> to vector<16x8xbf16>
    %15 = vector.extract_strided_slice %12 {offsets = [0, 32], sizes = [16, 8], strides = [1, 1]} : vector<16x64xbf16> to vector<16x8xbf16>
    %cst_9 = arith.constant dense<0.000000e+00> : vector<16x16xf32>
    %16 = tpu.matmul %13, %14, %cst_9 {dimension_numbers = #tpu.dot_dimension_numbers<[1], [1], [0], [0], [0, 0, 1, 0], [], []>} : vector<16x8xbf16>, vector<16x8xbf16>, vector<16x16xf32> -> vector<16x16xf32>
    %cst_10 = arith.constant dense<0xFF800000> : vector<16xf32>
    %17 = vector.multi_reduction <maximumf>, %16, %cst_10 [1] : vector<16x16xf32> to vector<16xf32>
    %18 = vector.shape_cast %17 : vector<16xf32> to vector<16x1xf32>
    %19 = vector.broadcast %18 : vector<16x1xf32> to vector<16x16xf32>
    %20 = arith.subf %16, %19 : vector<16x16xf32>
    %21 = math.exp %20 : vector<16x16xf32>
    %cst_11 = arith.constant dense<0.000000e+00> : vector<16xf32>
    %22 = vector.multi_reduction <add>, %21, %cst_11 [1] : vector<16x16xf32> to vector<16xf32>
    %23 = vector.shape_cast %22 : vector<16xf32> to vector<16x1xf32>
    %24 = tpu.reciprocal %23 {approx = true} : vector<16x1xf32> -> vector<16x1xf32>
    %25 = vector.broadcast %24 : vector<16x1xf32> to vector<16x16xf32>
    %26 = arith.mulf %21, %25 : vector<16x16xf32>
    %27 = arith.truncf %26 : vector<16x16xf32> to vector<16x16xbf16>
    %cst_12 = arith.constant dense<0.000000e+00> : vector<16x8xf32>
    %28 = tpu.matmul %27, %15, %cst_12 {dimension_numbers = #tpu.dot_dimension_numbers<[1], [0], [0], [1], [0, 0, 1, 1], [], []>} : vector<16x16xbf16>, vector<16x8xbf16>, vector<16x8xf32> -> vector<16x8xf32>
    %c0_13 = arith.constant 0 : index
    %c0_14 = arith.constant 0 : index
    %29 = vector.load %arg12[%c0_13, %c0_14] : memref<16x32xf32, #tpu.memory_space<vmem>>, vector<16x8xf32>
    tpu.vector_store %arg12[%c0_13, %c0_14], %28 {strides = array<i32>} : memref<16x32xf32, #tpu.memory_space<vmem>>, vector<16x8xf32>,
    %30 = vector.extract_strided_slice %11 {offsets = [0, 8], sizes = [16, 8], strides = [1, 1]} : vector<16x32xbf16> to vector<16x8xbf16>
    %31 = vector.extract_strided_slice %12 {offsets = [0, 8], sizes = [16, 8], strides = [1, 1]} : vector<16x64xbf16> to vector<16x8xbf16>
    %32 = vector.extract_strided_slice %12 {offsets = [0, 40], sizes = [16, 8], strides = [1, 1]} : vector<16x64xbf16> to vector<16x8xbf16>
    %cst_15 = arith.constant dense<0.000000e+00> : vector<16x16xf32>
    %33 = tpu.matmul %30, %31, %cst_15 {dimension_numbers = #tpu.dot_dimension_numbers<[1], [1], [0], [0], [0, 0, 1, 0], [], []>} : vector<16x8xbf16>, vector<16x8xbf16>, vector<16x16xf32> -> vector<16x16xf32>
    %cst_16 = arith.constant dense<0xFF800000> : vector<16xf32>
    %34 = vector.multi_reduction <maximumf>, %33, %cst_16 [1] : vector<16x16xf32> to vector<16xf32>
    %35 = vector.shape_cast %34 : vector<16xf32> to vector<16x1xf32>
    %36 = vector.broadcast %35 : vector<16x1xf32> to vector<16x16xf32>
    %37 = arith.subf %33, %36 : vector<16x16xf32>
    %38 = math.exp %37 : vector<16x16xf32>
    %cst_17 = arith.constant dense<0.000000e+00> : vector<16xf32>
    %39 = vector.multi_reduction <add>, %38, %cst_17 [1] : vector<16x16xf32> to vector<16xf32>
    %40 = vector.shape_cast %39 : vector<16xf32> to vector<16x1xf32>
    %41 = tpu.reciprocal %40 {approx = true} : vector<16x1xf32> -> vector<16x1xf32>
    %42 = vector.broadcast %41 : vector<16x1xf32> to vector<16x16xf32>
    %43 = arith.mulf %38, %42 : vector<16x16xf32>
    %44 = arith.truncf %43 : vector<16x16xf32> to vector<16x16xbf16>
    %cst_18 = arith.constant dense<0.000000e+00> : vector<16x8xf32>
    %45 = tpu.matmul %44, %32, %cst_18 {dimension_numbers = #tpu.dot_dimension_numbers<[1], [0], [0], [1], [0, 0, 1, 1], [], []>} : vector<16x16xbf16>, vector<16x8xbf16>, vector<16x8xf32> -> vector<16x8xf32>
    %c0_19 = arith.constant 0 : index
    %c8 = arith.constant 8 : index
    %46 = vector.load %arg12[%c0_19, %c8] : memref<16x32xf32, #tpu.memory_space<vmem>>, vector<16x8xf32>
    tpu.vector_store %arg12[%c0_19, %c8], %45 {strides = array<i32>} : memref<16x32xf32, #tpu.memory_space<vmem>>, vector<16x8xf32>,
    %47 = vector.extract_strided_slice %11 {offsets = [0, 16], sizes = [16, 8], strides = [1, 1]} : vector<16x32xbf16> to vector<16x8xbf16>
    %48 = vector.extract_strided_slice %12 {offsets = [0, 16], sizes = [16, 8], strides = [1, 1]} : vector<16x64xbf16> to vector<16x8xbf16>
    %49 = vector.extract_strided_slice %12 {offsets = [0, 48], sizes = [16, 8], strides = [1, 1]} : vector<16x64xbf16> to vector<16x8xbf16>
    %cst_20 = arith.constant dense<0.000000e+00> : vector<16x16xf32>
    %50 = tpu.matmul %47, %48, %cst_20 {dimension_numbers = #tpu.dot_dimension_numbers<[1], [1], [0], [0], [0, 0, 1, 0], [], []>} : vector<16x8xbf16>, vector<16x8xbf16>, vector<16x16xf32> -> vector<16x16xf32>
    %cst_21 = arith.constant dense<0xFF800000> : vector<16xf32>
    %51 = vector.multi_reduction <maximumf>, %50, %cst_21 [1] : vector<16x16xf32> to vector<16xf32>
    %52 = vector.shape_cast %51 : vector<16xf32> to vector<16x1xf32>
    %53 = vector.broadcast %52 : vector<16x1xf32> to vector<16x16xf32>
    %54 = arith.subf %50, %53 : vector<16x16xf32>
    %55 = math.exp %54 : vector<16x16xf32>
    %cst_22 = arith.constant dense<0.000000e+00> : vector<16xf32>
    %56 = vector.multi_reduction <add>, %55, %cst_22 [1] : vector<16x16xf32> to vector<16xf32>
    %57 = vector.shape_cast %56 : vector<16xf32> to vector<16x1xf32>
    %58 = tpu.reciprocal %57 {approx = true} : vector<16x1xf32> -> vector<16x1xf32>
    %59 = vector.broadcast %58 : vector<16x1xf32> to vector<16x16xf32>
    %60 = arith.mulf %55, %59 : vector<16x16xf32>
    %61 = arith.truncf %60 : vector<16x16xf32> to vector<16x16xbf16>
    %cst_23 = arith.constant dense<0.000000e+00> : vector<16x8xf32>
    %62 = tpu.matmul %61, %49, %cst_23 {dimension_numbers = #tpu.dot_dimension_numbers<[1], [0], [0], [1], [0, 0, 1, 1], [], []>} : vector<16x16xbf16>, vector<16x8xbf16>, vector<16x8xf32> -> vector<16x8xf32>
    %c0_24 = arith.constant 0 : index
    %c16 = arith.constant 16 : index
    %63 = vector.load %arg12[%c0_24, %c16] : memref<16x32xf32, #tpu.memory_space<vmem>>, vector<16x8xf32>
    tpu.vector_store %arg12[%c0_24, %c16], %62 {strides = array<i32>} : memref<16x32xf32, #tpu.memory_space<vmem>>, vector<16x8xf32>,
    %64 = vector.extract_strided_slice %11 {offsets = [0, 24], sizes = [16, 8], strides = [1, 1]} : vector<16x32xbf16> to vector<16x8xbf16>
    %65 = vector.extract_strided_slice %12 {offsets = [0, 24], sizes = [16, 8], strides = [1, 1]} : vector<16x64xbf16> to vector<16x8xbf16>
    %66 = vector.extract_strided_slice %12 {offsets = [0, 56], sizes = [16, 8], strides = [1, 1]} : vector<16x64xbf16> to vector<16x8xbf16>
    %cst_25 = arith.constant dense<0.000000e+00> : vector<16x16xf32>
    %67 = tpu.matmul %64, %65, %cst_25 {dimension_numbers = #tpu.dot_dimension_numbers<[1], [1], [0], [0], [0, 0, 1, 0], [], []>} : vector<16x8xbf16>, vector<16x8xbf16>, vector<16x16xf32> -> vector<16x16xf32>
    %cst_26 = arith.constant dense<0xFF800000> : vector<16xf32>
    %68 = vector.multi_reduction <maximumf>, %67, %cst_26 [1] : vector<16x16xf32> to vector<16xf32>
    %69 = vector.shape_cast %68 : vector<16xf32> to vector<16x1xf32>
    %70 = vector.broadcast %69 : vector<16x1xf32> to vector<16x16xf32>
    %71 = arith.subf %67, %70 : vector<16x16xf32>
    %72 = math.exp %71 : vector<16x16xf32>
    %cst_27 = arith.constant dense<0.000000e+00> : vector<16xf32>
    %73 = vector.multi_reduction <add>, %72, %cst_27 [1] : vector<16x16xf32> to vector<16xf32>
    %74 = vector.shape_cast %73 : vector<16xf32> to vector<16x1xf32>
    %75 = tpu.reciprocal %74 {approx = true} : vector<16x1xf32> -> vector<16x1xf32>
    %76 = vector.broadcast %75 : vector<16x1xf32> to vector<16x16xf32>
    %77 = arith.mulf %72, %76 : vector<16x16xf32>
    %78 = arith.truncf %77 : vector<16x16xf32> to vector<16x16xbf16>
    %cst_28 = arith.constant dense<0.000000e+00> : vector<16x8xf32>
    %79 = tpu.matmul %78, %66, %cst_28 {dimension_numbers = #tpu.dot_dimension_numbers<[1], [0], [0], [1], [0, 0, 1, 1], [], []>} : vector<16x16xbf16>, vector<16x8xbf16>, vector<16x8xf32> -> vector<16x8xf32>
    %c0_29 = arith.constant 0 : index
    %c24 = arith.constant 24 : index
    %80 = vector.load %arg12[%c0_29, %c24] : memref<16x32xf32, #tpu.memory_space<vmem>>, vector<16x8xf32>
    tpu.vector_store %arg12[%c0_29, %c24], %79 {strides = array<i32>} : memref<16x32xf32, #tpu.memory_space<vmem>>, vector<16x8xf32>,
    %c0_30 = arith.constant 0 : index
    %c0_31 = arith.constant 0 : index
    %81 = vector.load %arg12[%c0_30, %c0_31] : memref<16x32xf32, #tpu.memory_space<vmem>>, vector<16x32xf32>
    %82 = arith.truncf %81 : vector<16x32xf32> to vector<16x32xbf16>
    %c0_32 = arith.constant 0 : index
    %c0_33 = arith.constant 0 : index
    %83 = vector.load %arg8[%c0_32, %c0_33] : memref<32x32xbf16, #tpu.memory_space<vmem>>, vector<32x32xbf16>
    %cst_34 = arith.constant dense<0.000000e+00> : vector<16x32xf32>
    %84 = tpu.matmul %82, %83, %cst_34 {dimension_numbers = #tpu.dot_dimension_numbers<[1], [0], [0], [1], [0, 0, 1, 1], [], []>} : vector<16x32xbf16>, vector<32x32xbf16>, vector<16x32xf32> -> vector<16x32xf32>
    %c0_35 = arith.constant 0 : index
    %c0_36 = arith.constant 0 : index
    %85 = vector.load %arg9[%c0_35, %c0_36] : memref<1x32xf32, #tpu.memory_space<vmem>>, vector<1x32xf32>
    %86 = vector.broadcast %85 : vector<1x32xf32> to vector<16x32xf32>
    %87 = arith.addf %84, %86 : vector<16x32xf32>
    %c0_37 = arith.constant 0 : index
    %c0_38 = arith.constant 0 : index
    %c0_39 = arith.constant 0 : index
    %88 = vector.load %arg10[%c0_37, %c0_38, %c0_39] : memref<1x16x32xf32, #tpu.memory_space<vmem>>, vector<1x16x32xf32>
    %89 = vector.shape_cast %88 : vector<1x16x32xf32> to vector<16x32xf32>
    %90 = vector.shape_cast %87 : vector<16x32xf32> to vector<1x16x32xf32>
    tpu.vector_store %arg10[%c0_37, %c0_38, %c0_39], %90 {strides = array<i32>} : memref<1x16x32xf32, #tpu.memory_space<vmem>>, vector<1x16x32xf32>,
    return
  }
  func.func @transform_0(%arg0: i32, %arg1: i32) -> (i32, i32, i32) {
    %c0_i32 = arith.constant 0 : i32
    %c0_i32_0 = arith.constant 0 : i32
    return %arg0, %arg1, %c0_i32 : i32, i32, i32
  }
  func.func @transform_1(%arg0: i32, %arg1: i32) -> (i32, i32, i32) {
    %c0_i32 = arith.constant 0 : i32
    %c0_i32_0 = arith.constant 0 : i32
    %c0_i32_1 = arith.constant 0 : i32
    return %arg0, %c0_i32, %c0_i32_0 : i32, i32, i32
  }
  func.func @transform_2(%arg0: i32, %arg1: i32) -> (i32, i32) {
    %c0_i32 = arith.constant 0 : i32
    %c0_i32_0 = arith.constant 0 : i32
    %c0_i32_1 = arith.constant 0 : i32
    return %c0_i32, %c0_i32_0 : i32, i32
  }
  func.func @transform_3(%arg0: i32, %arg1: i32) -> (i32, i32) {
    %c0_i32 = arith.constant 0 : i32
    %c0_i32_0 = arith.constant 0 : i32
    %c0_i32_1 = arith.constant 0 : i32
    return %c0_i32, %c0_i32_0 : i32, i32
  }
  func.func @transform_4(%arg0: i32, %arg1: i32) -> (i32, i32) {
    %c0_i32 = arith.constant 0 : i32
    %c0_i32_0 = arith.constant 0 : i32
    %c0_i32_1 = arith.constant 0 : i32
    return %c0_i32, %c0_i32_0 : i32, i32
  }
  func.func @transform_5(%arg0: i32, %arg1: i32) -> (i32, i32) {
    %c0_i32 = arith.constant 0 : i32
    %c0_i32_0 = arith.constant 0 : i32
    %c0_i32_1 = arith.constant 0 : i32
    return %c0_i32, %c0_i32_0 : i32, i32
  }
  func.func @transform_6(%arg0: i32, %arg1: i32) -> (i32, i32) {
    %c0_i32 = arith.constant 0 : i32
    %c0_i32_0 = arith.constant 0 : i32
    %c0_i32_1 = arith.constant 0 : i32
    return %c0_i32, %c0_i32_0 : i32, i32
  }
  func.func @transform_7(%arg0: i32, %arg1: i32) -> (i32, i32) {
    %c0_i32 = arith.constant 0 : i32
    %c0_i32_0 = arith.constant 0 : i32
    %c0_i32_1 = arith.constant 0 : i32
    return %c0_i32, %c0_i32_0 : i32, i32
  }
  func.func @transform_8(%arg0: i32, %arg1: i32) -> (i32, i32, i32) {
    %c0_i32 = arith.constant 0 : i32
    %c0_i32_0 = arith.constant 0 : i32
    return %arg0, %arg1, %c0_i32 : i32, i32, i32
  }
}

</mosaic_0001>

<llo_original>
// kernel: tpu_custom_call.1
$region0: #{tpu_custom_call.1}
  #allocation0 [shape = 'u32[]', space=smem, size = 0x4, offset = 0x4, fixed_abs, tag = 'smem constant byte address 0x4 - core index']
  #allocation1 [shape = 'u32[144,128]{1,0:T(1,128)}', space=vmem, size = 0x12000, scoped, tag = 'internal scratch']
  #allocation2 [shape = 'bf16[16,64]{1,0:T(16,128)(2,1)}', space=vmem, size = 0x1000, scoped, tag = 'scratch operand']
  #allocation3 [shape = 'f32[16,32]{1,0:T(8,128)}', space=vmem, size = 0x2000, scoped, tag = 'scratch operand']
  %s0 = inlined_call_operand.hbm [shape: f32[2,16,32], index: 0, kind: input, shape index: {}]
  %s1 = inlined_call_operand.hbm [shape: f32[2,16,32], index: 1, kind: input, shape index: {}]
  %s2 = inlined_call_operand.hbm [shape: bf16[32,32], index: 2, kind: input, shape index: {}]
  %s3 = inlined_call_operand.vmem [shape: f32[1,32], index: 3, kind: input, shape index: {}]
  %s4 = inlined_call_operand.hbm [shape: bf16[32,64], index: 4, kind: input, shape index: {}]
  %s5 = inlined_call_operand.vmem [shape: f32[1,64], index: 5, kind: input, shape index: {}]
  %s6 = inlined_call_operand.vmem [shape: bf16[32,32], index: 6, kind: input, shape index: {}]
  %s7 = inlined_call_operand.vmem [shape: f32[1,32], index: 7, kind: input, shape index: {}]
  %s8 = inlined_call_operand.hbm [shape: f32[2,16,32], index: 8, kind: output, shape index: {}]
  %s9 = sld [smem:[#allocation0]]
  $region85: #{tpu_custom_call.1} parent=0
    _
  %s11 = ssub.s32 1, %s9
  %s12 = scalar_select 0, %s11, %s9
  $region1: #{tpu_custom_call.1} parent=0
    #allocation4 [shape = 'u8[16384]{0}', space=vmem, size = 0x4000, scoped, tag = 'input window, operand 0']
    #allocation5 [shape = 's32[2]{0}', space=sflag, size = 0x8, scoped, tag = 'scoped memory for tpu_custom_call.1']
    #allocation6 [shape = 's32[2]{0}', space=sflag, size = 0x8, scoped, tag = 'scoped memory for tpu_custom_call.1']
    #allocation7 [shape = 'u8[16384]{0}', space=vmem, size = 0x4000, scoped, tag = 'input window, operand 1']
    #allocation8 [shape = 's32[2]{0}', space=sflag, size = 0x8, scoped, tag = 'scoped memory for tpu_custom_call.1']
    #allocation9 [shape = 'u8[8192]{0}', space=vmem, size = 0x2000, scoped, tag = 'input window, operand 2, single buffered']
    #allocation10 [shape = 'u8[8192]{0}', space=vmem, size = 0x2000, scoped, tag = 'input window, operand 4, single buffered']
    #allocation11 [shape = 's32[1]{0}', space=sflag, size = 0x4, scoped, tag = 'scoped memory for tpu_custom_call.1']
    #allocation12 [shape = 'u8[16384]{0}', space=vmem, size = 0x4000, scoped, tag = 'output window, operand 0']
    %13 = vsyncpa [#allocation5], 0
    %s14 = scalar_lea.sflag [#allocation5], 1
    %15 = vsyncpa %s14, 0
    %16 = vsyncpa [#allocation8], 0
    %s17 = scalar_lea.sflag [#allocation8], 1
    %18 = vsyncpa %s17, 0
    %19 = vsyncpa [#allocation11], 0
    %20 = vsyncpa [#allocation6], 0
    %s21 = scalar_lea.sflag [#allocation6], 1
    %22 = vsyncpa %s21, 0
    loop: start=0, step=1, limit=4
    $region2: #{tpu_custom_call.1} parent=1 // loop_pre_header
      _
    $region3: #{tpu_custom_call.1} parent=1 // loop_header
      %s24 = sphi 0, %s28
      %p25 = scmp.ge.s32.totalorder %s24, 4
      %s31 = sphi 0, %s43
      %s32 = sphi 0, %s39
      %s33 = sphi 0, %s31
      %s34 = sphi 0, %s32
      %s35 = sphi 0, %s33
      %s36 = sphi 0, %s34
      %s48 = sphi 0, %s50
      %s51 = sphi 0, %s48
      %s52 = sphi 0, %s51
      %s68 = sphi 0, %s52
      %s74 = sphi 0, %s76
      %s77 = sphi 0, %s74
      %s78 = sphi 0, %s77
      %s94 = sphi 0, %s78
      %s98 = sphi 0, %s98
      %s100 = sphi 0, %s98
      %s101 = sphi 0, %s100
      %s115 = sphi 0, %s101
      %s119 = sphi 0, %s119
      %s121 = sphi 0, %s119
      %s122 = sphi 0, %s121
      %s136 = sphi 0, %s122
      %s140 = sphi 0, %s140
      %s142 = sphi 0, %s140
      %s143 = sphi 0, %s142
      %s157 = sphi 0, %s143
      %s161 = sphi 0, %s161
      %s163 = sphi 0, %s161
      %s164 = sphi 0, %s163
      %s178 = sphi 0, %s164
      %s182 = sphi 0, %s182
      %s184 = sphi 0, %s182
      %s185 = sphi 0, %s184
      %s199 = sphi 0, %s185
      %s203 = sphi 0, %s203
      %s205 = sphi 0, %s203
      %s206 = sphi 0, %s205
      %s220 = sphi 0, %s206
      %s228 = sphi 0, %s230
      %s231 = sphi 0, %s228
      %s232 = sphi 0, %s231
      %s248 = sphi 0, %s232
    $region4: #{tpu_custom_call.1} parent=1 // loop_header_branch
      %27 = sbr.rel (%p25) target = $region8
    $region5: #{tpu_custom_call.1} parent=1 // loop_body
      %s29 = ssub.s32 %s24, 1
      %s30 = ssub.s32 %s24, 2
      %s37 = sadd.s32 1, %s32
      %p38 = scmp.ge.s32.totalorder %s37, 1
      %s39 = scalar_select %p38, 0, %s37
      %s40 = sadd.s32 1, %s31
      %s41 = scalar_select %p38, %s40, %s31
      %p42 = scmp.ge.s32.totalorder %s41, 2
      %s43 = scalar_select %p42, 0, %s41
      %s44 = ssub.s32 %s31, %s43
      %s45 = ssub.s32 %s32, %s39
      %s46 = sor.u32 %s44, %s45
      %p47 = scmp.eq.s32.totalorder %s46, 0
      %s49 = sadd.s32 %s48, 1
      %s50 = scalar_select %p47, %s48, %s49
      %p53 = pneg %p47
      %p54 = scmp.eq.s32.totalorder %s24, 1
      %p55 = por %p53, %p54
      %p56 = scmp.ne.s32.totalorder %s48, %s51
      %p57 = scmp.eq.s32.totalorder %s24, 0
      %p58 = por %p56, %p57
      %p59 = scmp.ne.s32.totalorder %s48, %s51
      %p60 = scmp.eq.s32.totalorder %s29, 1
      %p61 = por %p59, %p60
      %p62 = scmp.ne.s32.totalorder %s51, %s52
      %p63 = scmp.eq.s32.totalorder %s29, 0
      %p64 = por %p62, %p63
      %p65 = scmp.ne.s32.totalorder %s51, %s52
      %p66 = scmp.eq.s32.totalorder %s30, 1
      %p67 = por %p65, %p66
      %p69 = scmp.ne.s32.totalorder %s52, %s68
      %p70 = scmp.eq.s32.totalorder %s30, 0
      %p71 = por %p69, %p70
      %s72 = ssub.s32 %s31, %s43
      %p73 = scmp.eq.s32.totalorder %s72, 0
      %s75 = sadd.s32 %s74, 1
      %s76 = scalar_select %p73, %s74, %s75
      %p79 = pneg %p73
      %p80 = scmp.eq.s32.totalorder %s24, 1
      %p81 = por %p79, %p80
      %p82 = scmp.ne.s32.totalorder %s74, %s77
      %p83 = scmp.eq.s32.totalorder %s24, 0
      %p84 = por %p82, %p83
      %p85 = scmp.ne.s32.totalorder %s74, %s77
      %p86 = scmp.eq.s32.totalorder %s29, 1
      %p87 = por %p85, %p86
      %p88 = scmp.ne.s32.totalorder %s77, %s78
      %p89 = scmp.eq.s32.totalorder %s29, 0
      %p90 = por %p88, %p89
      %p91 = scmp.ne.s32.totalorder %s77, %s78
      %p92 = scmp.eq.s32.totalorder %s30, 1
      %p93 = por %p91, %p92
      %p95 = scmp.ne.s32.totalorder %s78, %s94
      %p96 = scmp.eq.s32.totalorder %s30, 0
      %p97 = por %p95, %p96
      %s99 = sadd.s32 %s98, 1
      %p102 = scmp.eq.s32.totalorder %s24, 1
      %p103 = scmp.ne.s32.totalorder %s98, %s100
      %p104 = scmp.eq.s32.totalorder %s24, 0
      %p105 = por %p103, %p104
      %p106 = scmp.ne.s32.totalorder %s98, %s100
      %p107 = scmp.eq.s32.totalorder %s29, 1
      %p108 = por %p106, %p107
      %p109 = scmp.ne.s32.totalorder %s100, %s101
      %p110 = scmp.eq.s32.totalorder %s29, 0
      %p111 = por %p109, %p110
      %p112 = scmp.ne.s32.totalorder %s100, %s101
      %p113 = scmp.eq.s32.totalorder %s30, 1
      %p114 = por %p112, %p113
      %p116 = scmp.ne.s32.totalorder %s101, %s115
      %p117 = scmp.eq.s32.totalorder %s30, 0
      %p118 = por %p116, %p117
      %s120 = sadd.s32 %s119, 1
      %p123 = scmp.eq.s32.totalorder %s24, 1
      %p124 = scmp.ne.s32.totalorder %s119, %s121
      %p125 = scmp.eq.s32.totalorder %s24, 0
      %p126 = por %p124, %p125
      %p127 = scmp.ne.s32.totalorder %s119, %s121
      %p128 = scmp.eq.s32.totalorder %s29, 1
      %p129 = por %p127, %p128
      %p130 = scmp.ne.s32.totalorder %s121, %s122
      %p131 = scmp.eq.s32.totalorder %s29, 0
      %p132 = por %p130, %p131
      %p133 = scmp.ne.s32.totalorder %s121, %s122
      %p134 = scmp.eq.s32.totalorder %s30, 1
      %p135 = por %p133, %p134
      %p137 = scmp.ne.s32.totalorder %s122, %s136
      %p138 = scmp.eq.s32.totalorder %s30, 0
      %p139 = por %p137, %p138
      %s141 = sadd.s32 %s140, 1
      %p144 = scmp.eq.s32.totalorder %s24, 1
      %p145 = scmp.ne.s32.totalorder %s140, %s142
      %p146 = scmp.eq.s32.totalorder %s24, 0
      %p147 = por %p145, %p146
      %p148 = scmp.ne.s32.totalorder %s140, %s142
      %p149 = scmp.eq.s32.totalorder %s29, 1
      %p150 = por %p148, %p149
      %p151 = scmp.ne.s32.totalorder %s142, %s143
      %p152 = scmp.eq.s32.totalorder %s29, 0
      %p153 = por %p151, %p152
      %p154 = scmp.ne.s32.totalorder %s142, %s143
      %p155 = scmp.eq.s32.totalorder %s30, 1
      %p156 = por %p154, %p155
      %p158 = scmp.ne.s32.totalorder %s143, %s157
      %p159 = scmp.eq.s32.totalorder %s30, 0
      %p160 = por %p158, %p159
      %s162 = sadd.s32 %s161, 1
      %p165 = scmp.eq.s32.totalorder %s24, 1
      %p166 = scmp.ne.s32.totalorder %s161, %s163
      %p167 = scmp.eq.s32.totalorder %s24, 0
      %p168 = por %p166, %p167
      %p169 = scmp.ne.s32.totalorder %s161, %s163
      %p170 = scmp.eq.s32.totalorder %s29, 1
      %p171 = por %p169, %p170
      %p172 = scmp.ne.s32.totalorder %s163, %s164
      %p173 = scmp.eq.s32.totalorder %s29, 0
      %p174 = por %p172, %p173
      %p175 = scmp.ne.s32.totalorder %s163, %s164
      %p176 = scmp.eq.s32.totalorder %s30, 1
      %p177 = por %p175, %p176
      %p179 = scmp.ne.s32.totalorder %s164, %s178
      %p180 = scmp.eq.s32.totalorder %s30, 0
      %p181 = por %p179, %p180
      %s183 = sadd.s32 %s182, 1
      %p186 = scmp.eq.s32.totalorder %s24, 1
      %p187 = scmp.ne.s32.totalorder %s182, %s184
      %p188 = scmp.eq.s32.totalorder %s24, 0
      %p189 = por %p187, %p188
      %p190 = scmp.ne.s32.totalorder %s182, %s184
      %p191 = scmp.eq.s32.totalorder %s29, 1
      %p192 = por %p190, %p191
      %p193 = scmp.ne.s32.totalorder %s184, %s185
      %p194 = scmp.eq.s32.totalorder %s29, 0
      %p195 = por %p193, %p194
      %p196 = scmp.ne.s32.totalorder %s184, %s185
      %p197 = scmp.eq.s32.totalorder %s30, 1
      %p198 = por %p196, %p197
      %p200 = scmp.ne.s32.totalorder %s185, %s199
      %p201 = scmp.eq.s32.totalorder %s30, 0
      %p202 = por %p200, %p201
      %s204 = sadd.s32 %s203, 1
      %p207 = scmp.eq.s32.totalorder %s24, 1
      %p208 = scmp.ne.s32.totalorder %s203, %s205
      %p209 = scmp.eq.s32.totalorder %s24, 0
      %p210 = por %p208, %p209
      %p211 = scmp.ne.s32.totalorder %s203, %s205
      %p212 = scmp.eq.s32.totalorder %s29, 1
      %p213 = por %p211, %p212
      %p214 = scmp.ne.s32.totalorder %s205, %s206
      %p215 = scmp.eq.s32.totalorder %s29, 0
      %p216 = por %p214, %p215
      %p217 = scmp.ne.s32.totalorder %s205, %s206
      %p218 = scmp.eq.s32.totalorder %s30, 1
      %p219 = por %p217, %p218
      %p221 = scmp.ne.s32.totalorder %s206, %s220
      %p222 = scmp.eq.s32.totalorder %s30, 0
      %p223 = por %p221, %p222
      %s224 = ssub.s32 %s31, %s43
      %s225 = ssub.s32 %s32, %s39
      %s226 = sor.u32 %s224, %s225
      %p227 = scmp.eq.s32.totalorder %s226, 0
      %s229 = sadd.s32 %s228, 1
      %s230 = scalar_select %p227, %s228, %s229
      %p233 = pneg %p227
      %p234 = scmp.eq.s32.totalorder %s24, 1
      %p235 = por %p233, %p234
      %p236 = scmp.ne.s32.totalorder %s228, %s231
      %p237 = scmp.eq.s32.totalorder %s24, 0
      %p238 = por %p236, %p237
      %p239 = scmp.ne.s32.totalorder %s228, %s231
      %p240 = scmp.eq.s32.totalorder %s29, 1
      %p241 = por %p239, %p240
      %p242 = scmp.ne.s32.totalorder %s231, %s232
      %p243 = scmp.eq.s32.totalorder %s29, 0
      %p244 = por %p242, %p243
      %p245 = scmp.ne.s32.totalorder %s231, %s232
      %p246 = scmp.eq.s32.totalorder %s30, 1
      %p247 = por %p245, %p246
      %p249 = scmp.ne.s32.totalorder %s232, %s248
      %p250 = scmp.eq.s32.totalorder %s30, 0
      %p251 = por %p249, %p250
      %p252 = scmp.le.s32.totalorder 1, %s24
      %p253 = scmp.lt.s32.totalorder %s24, 3
      %p254 = pnand %p252, %p253
      %p255 = pneg %p254
      // Predicated region
      $region9: #{tpu_custom_call.1} parent=5 // pred_check
        _
      $region10: #{tpu_custom_call.1} parent=5 // pred_check_branch
        %257 = sbr.rel (%p254) target = $region12
      $region11: #{tpu_custom_call.1} parent=5 // pred_region
        %s258 = ssub.s32 %s24, 1
        // Predicated region
        $region13: #{tpu_custom_call.1} parent=11 // pred_check
          %p259 = pneg %p111
        $region14: #{tpu_custom_call.1} parent=11 // pred_check_branch
          %261 = sbr.rel (%p259) target = $region16
        $region15: #{tpu_custom_call.1} parent=11 // pred_region
          %s263 = ssub.s32 256, 256
          %264 = vsyncadd [#allocation8], %s263
          %s265 = sshll.u32 [#allocation9], 4
          %s266 = int_to_ptr.vmem [resolvable:$true] %s265
          %271 = dma.hbm_to_vmem [thread:$0]  %s2, 256, %s266, [#allocation8], 64, 64, 4
        $region16: #{tpu_custom_call.1} parent=11 // pred_fallthru
          _
        // Predicated region
        $region17: #{tpu_custom_call.1} parent=11 // pred_check
          %p272 = pneg %p132
        $region18: #{tpu_custom_call.1} parent=11 // pred_check_branch
          %274 = sbr.rel (%p272) target = $region20
        $region19: #{tpu_custom_call.1} parent=11 // pred_region
          _
        $region20: #{tpu_custom_call.1} parent=11 // pred_fallthru
          _
        // Predicated region
        $region21: #{tpu_custom_call.1} parent=11 // pred_check
          %p275 = pneg %p153
        $region22: #{tpu_custom_call.1} parent=11 // pred_check_branch
          %277 = sbr.rel (%p275) target = $region24
        $region23: #{tpu_custom_call.1} parent=11 // pred_region
          %s279 = ssub.s32 256, 256
          %280 = vsyncadd [#allocation11], %s279
          %s281 = sshll.u32 [#allocation10], 4
          %s282 = int_to_ptr.vmem [resolvable:$true] %s281
          %287 = dma.hbm_to_vmem [thread:$0]  %s4, 256, %s282, [#allocation11], 64, 64, 4
        $region24: #{tpu_custom_call.1} parent=11 // pred_fallthru
          _
        // Predicated region
        $region25: #{tpu_custom_call.1} parent=11 // pred_check
          %p288 = pneg %p174
        $region26: #{tpu_custom_call.1} parent=11 // pred_check_branch
          %290 = sbr.rel (%p288) target = $region28
        $region27: #{tpu_custom_call.1} parent=11 // pred_region
          _
        $region28: #{tpu_custom_call.1} parent=11 // pred_fallthru
          _
        // Predicated region
        $region29: #{tpu_custom_call.1} parent=11 // pred_check
          %p291 = pneg %p195
        $region30: #{tpu_custom_call.1} parent=11 // pred_check_branch
          %293 = sbr.rel (%p291) target = $region32
        $region31: #{tpu_custom_call.1} parent=11 // pred_region
          _
        $region32: #{tpu_custom_call.1} parent=11 // pred_fallthru
          _
        // Predicated region
        $region33: #{tpu_custom_call.1} parent=11 // pred_check
          %p294 = pneg %p216
        $region34: #{tpu_custom_call.1} parent=11 // pred_check_branch
          %296 = sbr.rel (%p294) target = $region36
        $region35: #{tpu_custom_call.1} parent=11 // pred_region
          _
        $region36: #{tpu_custom_call.1} parent=11 // pred_fallthru
          _
      $region12: #{tpu_custom_call.1} parent=5 // pred_fallthru
        _
      %p297 = scmp.lt.s32.totalorder %s24, 2
      // Predicated region
      $region37: #{tpu_custom_call.1} parent=5 // pred_check
        %p298 = pneg %p297
      $region38: #{tpu_custom_call.1} parent=5 // pred_check_branch
        %300 = sbr.rel (%p298) target = $region40
      $region39: #{tpu_custom_call.1} parent=5 // pred_region
        // Predicated region
        $region41: #{tpu_custom_call.1} parent=39 // pred_check
          %p301 = pneg %p58
        $region42: #{tpu_custom_call.1} parent=39 // pred_check_branch
          %303 = sbr.rel (%p301) target = $region44
        $region43: #{tpu_custom_call.1} parent=39 // pred_region
          %s304 = sand.u32 %s48, 1
          %s305 = scalar_lea.sflag [#allocation5], %s304
          %s306 = sand.u32 %s48, 1
          %s307 = smul.addr %s306, 16
          %s308 = scalar_lea.vmem [#allocation4], %s307
          %s309 = smul.u32 2, %s32
          %s311 = ssub.s32 256, 256
          %312 = vsyncadd %s305, %s311
          %s313 = smul.addr %s31, 2
          %s314 = sadd.s32 %s309, %s313
          %s315 = smul.addr %s314, 128
          %s316 = scalar_lea.hbm %s0, %s315
          %s317 = sshll.u32 %s308, 4
          %s318 = int_to_ptr.vmem [resolvable:$true] %s317
          %323 = dma.hbm_to_vmem [thread:$0]  %s316, 256, %s318, %s305, 128, 128, 8
        $region44: #{tpu_custom_call.1} parent=39 // pred_fallthru
          _
        // Predicated region
        $region45: #{tpu_custom_call.1} parent=39 // pred_check
          %p324 = pneg %p84
        $region46: #{tpu_custom_call.1} parent=39 // pred_check_branch
          %326 = sbr.rel (%p324) target = $region48
        $region47: #{tpu_custom_call.1} parent=39 // pred_region
          %s327 = sand.u32 %s24, 1
          %s328 = scalar_lea.sflag [#allocation8], %s327
          %s329 = sand.u32 %s74, 1
          %s330 = smul.addr %s329, 16
          %s331 = scalar_lea.vmem [#allocation7], %s330
          %s333 = ssub.s32 256, 256
          %334 = vsyncadd %s328, %s333
          %s335 = smul.addr %s31, 2
          %s336 = smul.addr %s335, 128
          %s337 = scalar_lea.hbm %s1, %s336
          %s338 = sshll.u32 %s331, 4
          %s339 = int_to_ptr.vmem [resolvable:$true] %s338
          %344 = dma.hbm_to_vmem [thread:$0]  %s337, 256, %s339, %s328, 128, 128, 8
        $region48: #{tpu_custom_call.1} parent=39 // pred_fallthru
          _
      $region40: #{tpu_custom_call.1} parent=5 // pred_fallthru
        _
      %p345 = scmp.le.s32.totalorder 1, %s24
      %p346 = scmp.lt.s32.totalorder %s24, 3
      %p347 = pnand %p345, %p346
      %p348 = pneg %p347
      // Predicated region
      $region49: #{tpu_custom_call.1} parent=5 // pred_check
        _
      $region50: #{tpu_custom_call.1} parent=5 // pred_check_branch
        %350 = sbr.rel (%p347) target = $region52
      $region51: #{tpu_custom_call.1} parent=5 // pred_region
        %s351 = ssub.s32 %s24, 1
        %s352 = sand.u32 %s51, 1
        %s353 = scalar_lea.sflag [#allocation5], %s352
        %s354 = sand.u32 %s51, 1
        %s355 = smul.addr %s354, 16
        %s356 = scalar_lea.vmem [#allocation4], %s355
        // Predicated region
        $region53: #{tpu_custom_call.1} parent=51 // pred_check
          %p357 = pneg %p64
        $region54: #{tpu_custom_call.1} parent=51 // pred_check_branch
          %359 = sbr.rel (%p357) target = $region56
        $region55: #{tpu_custom_call.1} parent=51 // pred_region
          %360 = dma.done %s353, 256
        $region56: #{tpu_custom_call.1} parent=51 // pred_fallthru
          _
        %s361 = sand.u32 %s29, 1
        %s362 = scalar_lea.sflag [#allocation8], %s361
        %s363 = sand.u32 %s77, 1
        %s364 = smul.addr %s363, 16
        %s365 = scalar_lea.vmem [#allocation7], %s364
        // Predicated region
        $region57: #{tpu_custom_call.1} parent=51 // pred_check
          %p366 = pneg %p90
        $region58: #{tpu_custom_call.1} parent=51 // pred_check_branch
          %368 = sbr.rel (%p366) target = $region60
        $region59: #{tpu_custom_call.1} parent=51 // pred_region
          %369 = dma.done %s362, 256
        $region60: #{tpu_custom_call.1} parent=51 // pred_fallthru
          _
        // Predicated region
        $region61: #{tpu_custom_call.1} parent=51 // pred_check
          %p370 = pneg %p111
        $region62: #{tpu_custom_call.1} parent=51 // pred_check_branch
          %372 = sbr.rel (%p370) target = $region64
        $region63: #{tpu_custom_call.1} parent=51 // pred_region
          %373 = dma.done [#allocation8], 256
        $region64: #{tpu_custom_call.1} parent=51 // pred_fallthru
          _
        // Predicated region
        $region65: #{tpu_custom_call.1} parent=51 // pred_check
          %p374 = pneg %p153
        $region66: #{tpu_custom_call.1} parent=51 // pred_check_branch
          %376 = sbr.rel (%p374) target = $region68
        $region67: #{tpu_custom_call.1} parent=51 // pred_region
          %377 = dma.done [#allocation11], 256
        $region68: #{tpu_custom_call.1} parent=51 // pred_fallthru
          _
        %s378 = sand.u32 %s51, 1
        %s379 = scalar_lea.sflag [#allocation5], %s378
        %s380 = sand.u32 %s51, 1
        %s381 = smul.addr %s380, 16
        %s382 = scalar_lea.vmem [#allocation4], %s381
        %p383 = pneg %p64
        %p384 = pneg %p61
        %s385 = sand.u32 %s29, 1
        %s386 = scalar_lea.sflag [#allocation8], %s385
        %s387 = sand.u32 %s77, 1
        %s388 = smul.addr %s387, 16
        %s389 = scalar_lea.vmem [#allocation7], %s388
        %p390 = pneg %p90
        %p391 = pneg %p87
        %p392 = pneg %p111
        %p393 = pneg %p108
        %p394 = pneg %p132
        %p395 = pneg %p129
        %p396 = pneg %p153
        %p397 = pneg %p150
        %p398 = pneg %p174
        %p399 = pneg %p171
        %p400 = pneg %p195
        %p401 = pneg %p192
        %p402 = pneg %p216
        %p403 = pneg %p213
        %p404 = pneg %p244
        %p405 = pneg %p241
        %s406 = sand.u32 %s231, 1
        %s407 = scalar_lea.sflag [#allocation6], %s406
        %s408 = sand.u32 %s231, 1
        %s409 = smul.addr %s408, 16
        %s410 = scalar_lea.vmem [#allocation12], %s409
        %s411 = smul.u32 2, %s34
        %s412 = smul.u32 2, %s34
        %p414 = scmp.eq.s32.totalorder %s34, 0
        // Predicated region
        $region69: #{tpu_custom_call.1} parent=51 // pred_check
          %p415 = pneg %p414
        $region70: #{tpu_custom_call.1} parent=51 // pred_check_branch
          %417 = sbr.rel (%p415) target = $region72
        $region71: #{tpu_custom_call.1} parent=51 // pred_region
          %v418 = vld [vmem:[%s365] sm:$0xff]
          %v419 = vld [vmem:[%s365 + $0x8] sm:$0xff]
          %v420 = vpack.c.bf16 %v419, %v418
          %v421 = vld [vmem:[#allocation10] sm:$0xf]
          %v422 = vld [vmem:[#allocation10 + $0x4] sm:$0xf]
          %v423 = vld [vmem:[#allocation10 + $0x8] sm:$0xf]
          %v424 = vld [vmem:[#allocation10 + $0xc] sm:$0xf]
          %v425 = vld [vmem:[%s5] sm:$0x1]
          %v427 = vlaneseq
          %v428 = vshrl.u32 %v427, 7
          %v429 = vsub.s32 0, %v428
          %v430 = vrot.slane %v425, %v429
          %v436 = vunpack.c.l.b16 %v421
          %v437 = vunpack.c.l.b16 %v422
          %v438 = vunpack.c.l.b16 %v423
          %v439 = vunpack.c.l.b16 %v424
          %v440 = vpack.c.b16 %v437, %v436
          %v441 = vpack.c.b16 %v439, %v438
          %vm444 = vcmask 261120
          %v446 = vsel %vm444, %v420, 0
          %448 = vmatprep.subr.bf16.mxu0 0
          %449 = vmatpush1.bf16.msra.mxu0 %v440
          %450 = vmatprep.subr.bf16.mxu0 0
          %451 = vmatpush1.bf16.msra.mxu0 %v441
          %452 = vmatprep.subr.bf16.mxu0 0
          %453 = vmatpush1.bf16.msra.mxu0 0
          %454 = vmatprep.subr.bf16.mxu0 0
          %455 = vmatpush1.bf16.msra.mxu0 0
          %456 = vmatprep.subr.bf16.mxu0 0
          %457 = vmatpush1.bf16.msra.mxu0 0
          %458 = vmatprep.subr.bf16.mxu0 0
          %459 = vmatpush1.bf16.msra.mxu0 0
          %460 = vmatprep.subr.bf16.mxu0 0
          %461 = vmatpush1.bf16.msra.mxu0 0
          %462 = vmatprep.subr.bf16.mxu0 0
          %463 = vmatpush1.bf16.msra.mxu0 0
          %464 = vmatprep.subr.bf16.mxu0 0
          %465 = vmatpush1.bf16.msra.mxu0 0
          %466 = vmatprep.subr.bf16.mxu0 0
          %467 = vmatpush1.bf16.msra.mxu0 0
          %468 = vmatprep.subr.bf16.mxu0 0
          %469 = vmatpush1.bf16.msra.mxu0 0
          %470 = vmatprep.subr.bf16.mxu0 0
          %471 = vmatpush1.bf16.msra.mxu0 0
          %472 = vmatprep.subr.bf16.mxu0 0
          %473 = vmatpush1.bf16.msra.mxu0 0
          %474 = vmatprep.subr.bf16.mxu0 0
          %475 = vmatpush1.bf16.msra.mxu0 0
          %476 = vmatprep.subr.bf16.mxu0 0
          %477 = vmatpush1.bf16.msra.mxu0 0
          %478 = vmatprep.subr.bf16.mxu0 0
          %479 = vmatpush1.bf16.msra.mxu0 0
          %480 = vmatprep.mubr.bf16.mxu0 0
          %481 = vmatmul.mubr.bf16.gmra.mrb[0].mxu0 %v446
          %v482 = vpop.f32.mrb[0].mxu0
          %v483 = vadd.f32 %v430, %v482
          %v484 = vpop.f32.mrb[0].mxu0
          %v485 = vpop.f32.mrb[0].mxu0
          %v486 = vadd.f32 %v430, %v485
          %v487 = vpop.f32.mrb[0].mxu0
          %488 = vdwg.mxu0
          %v489 = vpack.c.bf16 %v486, %v483
          %vm490 = vcmask 523264
          %491 = vst.msk [vmem:[#allocation2] sm:$0xff] %vm490, %v489
        $region72: #{tpu_custom_call.1} parent=51 // pred_fallthru
          _
        %v492 = vld [vmem:[%s356] sm:$0xff]
        %v493 = vld [vmem:[%s356 + $0x8] sm:$0xff]
        %v494 = vpack.c.bf16 %v493, %v492
        %v495 = vld [vmem:[#allocation9] sm:$0xf]
        %v496 = vld [vmem:[#allocation9 + $0x4] sm:$0xf]
        %v497 = vld [vmem:[#allocation9 + $0x8] sm:$0xf]
        %v498 = vld [vmem:[#allocation9 + $0xc] sm:$0xf]
        %v499 = vld [vmem:[%s3] sm:$0x1]
        %v501 = vlaneseq
        %v502 = vshrl.u32 %v501, 7
        %v503 = vsub.s32 0, %v502
        %v504 = vrot.slane %v499, %v503
        %v510 = vunpack.c.l.b16 %v495
        %v511 = vunpack.c.l.b16 %v496
        %v512 = vunpack.c.l.b16 %v497
        %v513 = vunpack.c.l.b16 %v498
        %v514 = vpack.c.b16 %v511, %v510
        %v515 = vpack.c.b16 %v513, %v512
        %vm518 = vcmask 261120
        %v520 = vsel %vm518, %v494, 0
        %522 = vmatprep.subr.bf16.mxu0 0
        %523 = vmatpush1.bf16.msra.mxu0 %v514
        %524 = vmatprep.subr.bf16.mxu0 0
        %525 = vmatpush1.bf16.msra.mxu0 %v515
        %526 = vmatprep.subr.bf16.mxu0 0
        %527 = vmatpush1.bf16.msra.mxu0 0
        %528 = vmatprep.subr.bf16.mxu0 0
        %529 = vmatpush1.bf16.msra.mxu0 0
        %530 = vmatprep.subr.bf16.mxu0 0
        %531 = vmatpush1.bf16.msra.mxu0 0
        %532 = vmatprep.subr.bf16.mxu0 0
        %533 = vmatpush1.bf16.msra.mxu0 0
        %534 = vmatprep.subr.bf16.mxu0 0
        %535 = vmatpush1.bf16.msra.mxu0 0
        %536 = vmatprep.subr.bf16.mxu0 0
        %537 = vmatpush1.bf16.msra.mxu0 0
        %538 = vmatprep.subr.bf16.mxu0 0
        %539 = vmatpush1.bf16.msra.mxu0 0
        %540 = vmatprep.subr.bf16.mxu0 0
        %541 = vmatpush1.bf16.msra.mxu0 0
        %542 = vmatprep.subr.bf16.mxu0 0
        %543 = vmatpush1.bf16.msra.mxu0 0
        %544 = vmatprep.subr.bf16.mxu0 0
        %545 = vmatpush1.bf16.msra.mxu0 0
        %546 = vmatprep.subr.bf16.mxu0 0
        %547 = vmatpush1.bf16.msra.mxu0 0
        %548 = vmatprep.subr.bf16.mxu0 0
        %549 = vmatpush1.bf16.msra.mxu0 0
        %550 = vmatprep.subr.bf16.mxu0 0
        %551 = vmatpush1.bf16.msra.mxu0 0
        %552 = vmatprep.subr.bf16.mxu0 0
        %553 = vmatpush1.bf16.msra.mxu0 0
        %554 = vmatprep.mubr.bf16.mxu0 0
        %555 = vmatmul.mubr.bf16.gmra.mrb[0].mxu0 %v520
        %v556 = vpop.f32.mrb[0].mxu0
        %v557 = vadd.f32 %v504, %v556
        %v558 = vpop.f32.mrb[0].mxu0
        %v559 = vpop.f32.mrb[0].mxu0
        %v560 = vadd.f32 %v504, %v559
        %v561 = vpop.f32.mrb[0].mxu0
        %562 = vdwg.mxu0
        %v563 = vpack.c.bf16 %v560, %v557
        %v564 = vld [vmem:[#allocation2] sm:$0xff]
        %vm565 = vcmask 64512
        %v567 = vsel %vm565, %v563, 0
        %v570 = vsel %vm565, %v564, 0
        %572 = vmatprep.subr.bf16.mxu0 0
        %573 = vmatpush1.bf16.xpose.msra.mxu0 %v570
        %574 = vmatprep.subr.bf16.mxu0 0
        %575 = vmatpush1.bf16.xpose.msra.mxu0 0
        %576 = vmatprep.subr.bf16.mxu0 0
        %577 = vmatpush1.bf16.xpose.msra.mxu0 0
        %578 = vmatprep.subr.bf16.mxu0 0
        %579 = vmatpush1.bf16.xpose.msra.mxu0 0
        %580 = vmatprep.subr.bf16.mxu0 0
        %581 = vmatpush1.bf16.xpose.msra.mxu0 0
        %582 = vmatprep.subr.bf16.mxu0 0
        %583 = vmatpush1.bf16.xpose.msra.mxu0 0
        %584 = vmatprep.subr.bf16.mxu0 0
        %585 = vmatpush1.bf16.xpose.msra.mxu0 0
        %586 = vmatprep.subr.bf16.mxu0 0
        %587 = vmatpush1.bf16.xpose.msra.mxu0 0
        %588 = vmatprep.subr.bf16.mxu0 0
        %589 = vmatpush1.bf16.xpose.msra.mxu0 0
        %590 = vmatprep.subr.bf16.mxu0 0
        %591 = vmatpush1.bf16.xpose.msra.mxu0 0
        %592 = vmatprep.subr.bf16.mxu0 0
        %593 = vmatpush1.bf16.xpose.msra.mxu0 0
        %594 = vmatprep.subr.bf16.mxu0 0
        %595 = vmatpush1.bf16.xpose.msra.mxu0 0
        %596 = vmatprep.subr.bf16.mxu0 0
        %597 = vmatpush1.bf16.xpose.msra.mxu0 0
        %598 = vmatprep.subr.bf16.mxu0 0
        %599 = vmatpush1.bf16.xpose.msra.mxu0 0
        %600 = vmatprep.subr.bf16.mxu0 0
        %601 = vmatpush1.bf16.xpose.msra.mxu0 0
        %602 = vmatprep.subr.bf16.mxu0 0
        %603 = vmatpush1.bf16.xpose.msra.mxu0 0
        %604 = vmatprep.mubr.bf16.mxu0 0
        %605 = vmatmul.mubr.bf16.gmra.mrb[0].mxu0 %v567
        %v606 = vpop.f32.mrb[0].mxu0
        %v607 = vadd.f32 0.0, %v606
        %v608 = vpop.f32.mrb[0].mxu0
        %v609 = vpop.f32.mrb[0].mxu0
        %v610 = vadd.f32 0.0, %v609
        %v611 = vpop.f32.mrb[0].mxu0
        %612 = vdwg.mxu0
        %vm613 = vcmask 130048
        %v614 = vsel %vm613, %v607, -inf
        %615 = vmax.xlane.f32.xlu0 %v614
        %v616 = vpop.xlane.xlu0 %615
        %v617 = vsel %vm613, %v610, -inf
        %618 = vmax.xlane.f32.xlu0 %v617
        %v619 = vpop.xlane.xlu0 %618
        %v620 = vsub.f32 %v607, %v616
        %v621 = vsub.f32 %v610, %v619
        %v622 = vmul.f32 %v620, 1.442695
        %v623 = vpow.pop %v622
        %v624 = vmul.f32 %v621, 1.442695
        %v625 = vpow.pop %v624
        %v626 = vsel %vm613, %v623, 0.0
        %627 = vadd.xlane.f32.xlu0 %v626
        %v628 = vpop.xlane.xlu0 %627
        %v629 = vsel %vm613, %v625, 0.0
        %630 = vadd.xlane.f32.xlu0 %v629
        %v631 = vpop.xlane.xlu0 %630
        %v632 = vrcp.pop %v628
        %v633 = vrcp.pop %v631
        %v634 = vmul.f32 %v623, %v632
        %v635 = vmul.f32 %v625, %v633
        %v636 = vpack.c.bf16 %v635, %v634
        %638 = vrot.lane.b32.xlu0 %v564, 96
        %v639 = vpop.permute.xlu0 %638
        %v642 = vsel %vm613, %v636, 0
        %644 = vmatprep.subr.bf16.mxu0 0
        %645 = vmatpush1.bf16.msra.mxu0 %v639
        %646 = vmatprep.subr.bf16.mxu0 0
        %647 = vmatpush1.bf16.msra.mxu0 0
        %648 = vmatprep.subr.bf16.mxu0 0
        %649 = vmatpush1.bf16.msra.mxu0 0
        %650 = vmatprep.subr.bf16.mxu0 0
        %651 = vmatpush1.bf16.msra.mxu0 0
        %652 = vmatprep.subr.bf16.mxu0 0
        %653 = vmatpush1.bf16.msra.mxu0 0
        %654 = vmatprep.subr.bf16.mxu0 0
        %655 = vmatpush1.bf16.msra.mxu0 0
        %656 = vmatprep.subr.bf16.mxu0 0
        %657 = vmatpush1.bf16.msra.mxu0 0
        %658 = vmatprep.subr.bf16.mxu0 0
        %659 = vmatpush1.bf16.msra.mxu0 0
        %660 = vmatprep.subr.bf16.mxu0 0
        %661 = vmatpush1.bf16.msra.mxu0 0
        %662 = vmatprep.subr.bf16.mxu0 0
        %663 = vmatpush1.bf16.msra.mxu0 0
        %664 = vmatprep.subr.bf16.mxu0 0
        %665 = vmatpush1.bf16.msra.mxu0 0
        %666 = vmatprep.subr.bf16.mxu0 0
        %667 = vmatpush1.bf16.msra.mxu0 0
        %668 = vmatprep.subr.bf16.mxu0 0
        %669 = vmatpush1.bf16.msra.mxu0 0
        %670 = vmatprep.subr.bf16.mxu0 0
        %671 = vmatpush1.bf16.msra.mxu0 0
        %672 = vmatprep.subr.bf16.mxu0 0
        %673 = vmatpush1.bf16.msra.mxu0 0
        %674 = vmatprep.subr.bf16.mxu0 0
        %675 = vmatpush1.bf16.msra.mxu0 0
        %676 = vmatprep.mubr.bf16.mxu0 0
        %677 = vmatmul.mubr.bf16.gmra.mrb[0].mxu0 %v642
        %v678 = vpop.f32.mrb[0].mxu0
        %v679 = vadd.f32 0.0, %v678
        %v680 = vpop.f32.mrb[0].mxu0
        %v681 = vpop.f32.mrb[0].mxu0
        %v682 = vadd.f32 0.0, %v681
        %v683 = vpop.f32.mrb[0].mxu0
        %684 = vdwg.mxu0
        %685 = vst.msk [vmem:[#allocation3] sm:$0xff] %vm565, %v679
        %686 = vst.msk [vmem:[#allocation3 + $0x8] sm:$0xff] %vm565, %v682
        %688 = vrot.lane.b32.xlu0 %v563, 120
        %v689 = vpop.permute.xlu0 %688
        %690 = vrot.lane.b32.xlu0 %v564, 120
        %v691 = vpop.permute.xlu0 %690
        %v693 = vsel %vm565, %v689, 0
        %v696 = vsel %vm565, %v691, 0
        %698 = vmatprep.subr.bf16.mxu0 0
        %699 = vmatpush1.bf16.xpose.msra.mxu0 %v696
        %700 = vmatprep.subr.bf16.mxu0 0
        %701 = vmatpush1.bf16.xpose.msra.mxu0 0
        %702 = vmatprep.subr.bf16.mxu0 0
        %703 = vmatpush1.bf16.xpose.msra.mxu0 0
        %704 = vmatprep.subr.bf16.mxu0 0
        %705 = vmatpush1.bf16.xpose.msra.mxu0 0
        %706 = vmatprep.subr.bf16.mxu0 0
        %707 = vmatpush1.bf16.xpose.msra.mxu0 0
        %708 = vmatprep.subr.bf16.mxu0 0
        %709 = vmatpush1.bf16.xpose.msra.mxu0 0
        %710 = vmatprep.subr.bf16.mxu0 0
        %711 = vmatpush1.bf16.xpose.msra.mxu0 0
        %712 = vmatprep.subr.bf16.mxu0 0
        %713 = vmatpush1.bf16.xpose.msra.mxu0 0
        %714 = vmatprep.subr.bf16.mxu0 0
        %715 = vmatpush1.bf16.xpose.msra.mxu0 0
        %716 = vmatprep.subr.bf16.mxu0 0
        %717 = vmatpush1.bf16.xpose.msra.mxu0 0
        %718 = vmatprep.subr.bf16.mxu0 0
        %719 = vmatpush1.bf16.xpose.msra.mxu0 0
        %720 = vmatprep.subr.bf16.mxu0 0
        %721 = vmatpush1.bf16.xpose.msra.mxu0 0
        %722 = vmatprep.subr.bf16.mxu0 0
        %723 = vmatpush1.bf16.xpose.msra.mxu0 0
        %724 = vmatprep.subr.bf16.mxu0 0
        %725 = vmatpush1.bf16.xpose.msra.mxu0 0
        %726 = vmatprep.subr.bf16.mxu0 0
        %727 = vmatpush1.bf16.xpose.msra.mxu0 0
        %728 = vmatprep.subr.bf16.mxu0 0
        %729 = vmatpush1.bf16.xpose.msra.mxu0 0
        %730 = vmatprep.mubr.bf16.mxu0 0
        %731 = vmatmul.mubr.bf16.gmra.mrb[0].mxu0 %v693
        %v732 = vpop.f32.mrb[0].mxu0
        %v733 = vadd.f32 0.0, %v732
        %v734 = vpop.f32.mrb[0].mxu0
        %v735 = vpop.f32.mrb[0].mxu0
        %v736 = vadd.f32 0.0, %v735
        %v737 = vpop.f32.mrb[0].mxu0
        %738 = vdwg.mxu0
        %v739 = vsel %vm613, %v733, -inf
        %740 = vmax.xlane.f32.xlu0 %v739
        %v741 = vpop.xlane.xlu0 %740
        %v742 = vsel %vm613, %v736, -inf
        %743 = vmax.xlane.f32.xlu0 %v742
        %v744 = vpop.xlane.xlu0 %743
        %v745 = vsub.f32 %v733, %v741
        %v746 = vsub.f32 %v736, %v744
        %v747 = vmul.f32 %v745, 1.442695
        %v748 = vpow.pop %v747
        %v749 = vmul.f32 %v746, 1.442695
        %v750 = vpow.pop %v749
        %v751 = vsel %vm613, %v748, 0.0
        %752 = vadd.xlane.f32.xlu0 %v751
        %v753 = vpop.xlane.xlu0 %752
        %v754 = vsel %vm613, %v750, 0.0
        %755 = vadd.xlane.f32.xlu0 %v754
        %v756 = vpop.xlane.xlu0 %755
        %v757 = vrcp.pop %v753
        %v758 = vrcp.pop %v756
        %v759 = vmul.f32 %v748, %v757
        %v760 = vmul.f32 %v750, %v758
        %v761 = vpack.c.bf16 %v760, %v759
        %762 = vrot.lane.b32.xlu0 %v564, 88
        %v763 = vpop.permute.xlu0 %762
        %v766 = vsel %vm613, %v761, 0
        %768 = vmatprep.subr.bf16.mxu0 0
        %769 = vmatpush1.bf16.msra.mxu0 %v763
        %770 = vmatprep.subr.bf16.mxu0 0
        %771 = vmatpush1.bf16.msra.mxu0 0
        %772 = vmatprep.subr.bf16.mxu0 0
        %773 = vmatpush1.bf16.msra.mxu0 0
        %774 = vmatprep.subr.bf16.mxu0 0
        %775 = vmatpush1.bf16.msra.mxu0 0
        %776 = vmatprep.subr.bf16.mxu0 0
        %777 = vmatpush1.bf16.msra.mxu0 0
        %778 = vmatprep.subr.bf16.mxu0 0
        %779 = vmatpush1.bf16.msra.mxu0 0
        %780 = vmatprep.subr.bf16.mxu0 0
        %781 = vmatpush1.bf16.msra.mxu0 0
        %782 = vmatprep.subr.bf16.mxu0 0
        %783 = vmatpush1.bf16.msra.mxu0 0
        %784 = vmatprep.subr.bf16.mxu0 0
        %785 = vmatpush1.bf16.msra.mxu0 0
        %786 = vmatprep.subr.bf16.mxu0 0
        %787 = vmatpush1.bf16.msra.mxu0 0
        %788 = vmatprep.subr.bf16.mxu0 0
        %789 = vmatpush1.bf16.msra.mxu0 0
        %790 = vmatprep.subr.bf16.mxu0 0
        %791 = vmatpush1.bf16.msra.mxu0 0
        %792 = vmatprep.subr.bf16.mxu0 0
        %793 = vmatpush1.bf16.msra.mxu0 0
        %794 = vmatprep.subr.bf16.mxu0 0
        %795 = vmatpush1.bf16.msra.mxu0 0
        %796 = vmatprep.subr.bf16.mxu0 0
        %797 = vmatpush1.bf16.msra.mxu0 0
        %798 = vmatprep.subr.bf16.mxu0 0
        %799 = vmatpush1.bf16.msra.mxu0 0
        %800 = vmatprep.mubr.bf16.mxu0 0
        %801 = vmatmul.mubr.bf16.gmra.mrb[0].mxu0 %v766
        %v802 = vpop.f32.mrb[0].mxu0
        %v803 = vadd.f32 0.0, %v802
        %v804 = vpop.f32.mrb[0].mxu0
        %v805 = vpop.f32.mrb[0].mxu0
        %v806 = vadd.f32 0.0, %v805
        %v807 = vpop.f32.mrb[0].mxu0
        %808 = vdwg.mxu0
        %811 = vrot.lane.b32.xlu0 %v803, 8
        %v812 = vpop.permute.xlu0 %811
        %813 = vrot.lane.b32.xlu0 %v806, 8
        %v814 = vpop.permute.xlu0 %813
        %vm817 = vcmask 130112
        %818 = vst.msk [vmem:[#allocation3] sm:$0xff] %vm817, %v812
        %819 = vst.msk [vmem:[#allocation3 + $0x8] sm:$0xff] %vm817, %v814
        %820 = vrot.lane.b32.xlu0 %v563, 112
        %v821 = vpop.permute.xlu0 %820
        %822 = vrot.lane.b32.xlu0 %v564, 112
        %v823 = vpop.permute.xlu0 %822
        %v825 = vsel %vm565, %v821, 0
        %v828 = vsel %vm565, %v823, 0
        %830 = vmatprep.subr.bf16.mxu0 0
        %831 = vmatpush1.bf16.xpose.msra.mxu0 %v828
        %832 = vmatprep.subr.bf16.mxu0 0
        %833 = vmatpush1.bf16.xpose.msra.mxu0 0
        %834 = vmatprep.subr.bf16.mxu0 0
        %835 = vmatpush1.bf16.xpose.msra.mxu0 0
        %836 = vmatprep.subr.bf16.mxu0 0
        %837 = vmatpush1.bf16.xpose.msra.mxu0 0
        %838 = vmatprep.subr.bf16.mxu0 0
        %839 = vmatpush1.bf16.xpose.msra.mxu0 0
        %840 = vmatprep.subr.bf16.mxu0 0
        %841 = vmatpush1.bf16.xpose.msra.mxu0 0
        %842 = vmatprep.subr.bf16.mxu0 0
        %843 = vmatpush1.bf16.xpose.msra.mxu0 0
        %844 = vmatprep.subr.bf16.mxu0 0
        %845 = vmatpush1.bf16.xpose.msra.mxu0 0
        %846 = vmatprep.subr.bf16.mxu0 0
        %847 = vmatpush1.bf16.xpose.msra.mxu0 0
        %848 = vmatprep.subr.bf16.mxu0 0
        %849 = vmatpush1.bf16.xpose.msra.mxu0 0
        %850 = vmatprep.subr.bf16.mxu0 0
        %851 = vmatpush1.bf16.xpose.msra.mxu0 0
        %852 = vmatprep.subr.bf16.mxu0 0
        %853 = vmatpush1.bf16.xpose.msra.mxu0 0
        %854 = vmatprep.subr.bf16.mxu0 0
        %855 = vmatpush1.bf16.xpose.msra.mxu0 0
        %856 = vmatprep.subr.bf16.mxu0 0
        %857 = vmatpush1.bf16.xpose.msra.mxu0 0
        %858 = vmatprep.subr.bf16.mxu0 0
        %859 = vmatpush1.bf16.xpose.msra.mxu0 0
        %860 = vmatprep.subr.bf16.mxu0 0
        %861 = vmatpush1.bf16.xpose.msra.mxu0 0
        %862 = vmatprep.mubr.bf16.mxu0 0
        %863 = vmatmul.mubr.bf16.gmra.mrb[0].mxu0 %v825
        %v864 = vpop.f32.mrb[0].mxu0
        %v865 = vadd.f32 0.0, %v864
        %v866 = vpop.f32.mrb[0].mxu0
        %v867 = vpop.f32.mrb[0].mxu0
        %v868 = vadd.f32 0.0, %v867
        %v869 = vpop.f32.mrb[0].mxu0
        %870 = vdwg.mxu0
        %v871 = vsel %vm613, %v865, -inf
        %872 = vmax.xlane.f32.xlu0 %v871
        %v873 = vpop.xlane.xlu0 %872
        %v874 = vsel %vm613, %v868, -inf
        %875 = vmax.xlane.f32.xlu0 %v874
        %v876 = vpop.xlane.xlu0 %875
        %v877 = vsub.f32 %v865, %v873
        %v878 = vsub.f32 %v868, %v876
        %v879 = vmul.f32 %v877, 1.442695
        %v880 = vpow.pop %v879
        %v881 = vmul.f32 %v878, 1.442695
        %v882 = vpow.pop %v881
        %v883 = vsel %vm613, %v880, 0.0
        %884 = vadd.xlane.f32.xlu0 %v883
        %v885 = vpop.xlane.xlu0 %884
        %v886 = vsel %vm613, %v882, 0.0
        %887 = vadd.xlane.f32.xlu0 %v886
        %v888 = vpop.xlane.xlu0 %887
        %v889 = vrcp.pop %v885
        %v890 = vrcp.pop %v888
        %v891 = vmul.f32 %v880, %v889
        %v892 = vmul.f32 %v882, %v890
        %v893 = vpack.c.bf16 %v892, %v891
        %894 = vrot.lane.b32.xlu0 %v564, 80
        %v895 = vpop.permute.xlu0 %894
        %v898 = vsel %vm613, %v893, 0
        %900 = vmatprep.subr.bf16.mxu0 0
        %901 = vmatpush1.bf16.msra.mxu0 %v895
        %902 = vmatprep.subr.bf16.mxu0 0
        %903 = vmatpush1.bf16.msra.mxu0 0
        %904 = vmatprep.subr.bf16.mxu0 0
        %905 = vmatpush1.bf16.msra.mxu0 0
        %906 = vmatprep.subr.bf16.mxu0 0
        %907 = vmatpush1.bf16.msra.mxu0 0
        %908 = vmatprep.subr.bf16.mxu0 0
        %909 = vmatpush1.bf16.msra.mxu0 0
        %910 = vmatprep.subr.bf16.mxu0 0
        %911 = vmatpush1.bf16.msra.mxu0 0
        %912 = vmatprep.subr.bf16.mxu0 0
        %913 = vmatpush1.bf16.msra.mxu0 0
        %914 = vmatprep.subr.bf16.mxu0 0
        %915 = vmatpush1.bf16.msra.mxu0 0
        %916 = vmatprep.subr.bf16.mxu0 0
        %917 = vmatpush1.bf16.msra.mxu0 0
        %918 = vmatprep.subr.bf16.mxu0 0
        %919 = vmatpush1.bf16.msra.mxu0 0
        %920 = vmatprep.subr.bf16.mxu0 0
        %921 = vmatpush1.bf16.msra.mxu0 0
        %922 = vmatprep.subr.bf16.mxu0 0
        %923 = vmatpush1.bf16.msra.mxu0 0
        %924 = vmatprep.subr.bf16.mxu0 0
        %925 = vmatpush1.bf16.msra.mxu0 0
        %926 = vmatprep.subr.bf16.mxu0 0
        %927 = vmatpush1.bf16.msra.mxu0 0
        %928 = vmatprep.subr.bf16.mxu0 0
        %929 = vmatpush1.bf16.msra.mxu0 0
        %930 = vmatprep.subr.bf16.mxu0 0
        %931 = vmatpush1.bf16.msra.mxu0 0
        %932 = vmatprep.mubr.bf16.mxu0 0
        %933 = vmatmul.mubr.bf16.gmra.mrb[0].mxu0 %v898
        %v934 = vpop.f32.mrb[0].mxu0
        %v935 = vadd.f32 0.0, %v934
        %v936 = vpop.f32.mrb[0].mxu0
        %v937 = vpop.f32.mrb[0].mxu0
        %v938 = vadd.f32 0.0, %v937
        %v939 = vpop.f32.mrb[0].mxu0
        %940 = vdwg.mxu0
        %943 = vrot.lane.b32.xlu0 %v935, 16
        %v944 = vpop.permute.xlu0 %943
        %945 = vrot.lane.b32.xlu0 %v938, 16
        %v946 = vpop.permute.xlu0 %945
        %vm949 = vcmask 195712
        %950 = vst.msk [vmem:[#allocation3] sm:$0xff] %vm949, %v944
        %951 = vst.msk [vmem:[#allocation3 + $0x8] sm:$0xff] %vm949, %v946
        %952 = vrot.lane.b32.xlu0 %v563, 104
        %v953 = vpop.permute.xlu0 %952
        %954 = vrot.lane.b32.xlu0 %v564, 104
        %v955 = vpop.permute.xlu0 %954
        %v957 = vsel %vm565, %v953, 0
        %v960 = vsel %vm565, %v955, 0
        %962 = vmatprep.subr.bf16.mxu0 0
        %963 = vmatpush1.bf16.xpose.msra.mxu0 %v960
        %964 = vmatprep.subr.bf16.mxu0 0
        %965 = vmatpush1.bf16.xpose.msra.mxu0 0
        %966 = vmatprep.subr.bf16.mxu0 0
        %967 = vmatpush1.bf16.xpose.msra.mxu0 0
        %968 = vmatprep.subr.bf16.mxu0 0
        %969 = vmatpush1.bf16.xpose.msra.mxu0 0
        %970 = vmatprep.subr.bf16.mxu0 0
        %971 = vmatpush1.bf16.xpose.msra.mxu0 0
        %972 = vmatprep.subr.bf16.mxu0 0
        %973 = vmatpush1.bf16.xpose.msra.mxu0 0
        %974 = vmatprep.subr.bf16.mxu0 0
        %975 = vmatpush1.bf16.xpose.msra.mxu0 0
        %976 = vmatprep.subr.bf16.mxu0 0
        %977 = vmatpush1.bf16.xpose.msra.mxu0 0
        %978 = vmatprep.subr.bf16.mxu0 0
        %979 = vmatpush1.bf16.xpose.msra.mxu0 0
        %980 = vmatprep.subr.bf16.mxu0 0
        %981 = vmatpush1.bf16.xpose.msra.mxu0 0
        %982 = vmatprep.subr.bf16.mxu0 0
        %983 = vmatpush1.bf16.xpose.msra.mxu0 0
        %984 = vmatprep.subr.bf16.mxu0 0
        %985 = vmatpush1.bf16.xpose.msra.mxu0 0
        %986 = vmatprep.subr.bf16.mxu0 0
        %987 = vmatpush1.bf16.xpose.msra.mxu0 0
        %988 = vmatprep.subr.bf16.mxu0 0
        %989 = vmatpush1.bf16.xpose.msra.mxu0 0
        %990 = vmatprep.subr.bf16.mxu0 0
        %991 = vmatpush1.bf16.xpose.msra.mxu0 0
        %992 = vmatprep.subr.bf16.mxu0 0
        %993 = vmatpush1.bf16.xpose.msra.mxu0 0
        %994 = vmatprep.mubr.bf16.mxu0 0
        %995 = vmatmul.mubr.bf16.gmra.mrb[0].mxu0 %v957
        %v996 = vpop.f32.mrb[0].mxu0
        %v997 = vadd.f32 0.0, %v996
        %v998 = vpop.f32.mrb[0].mxu0
        %v999 = vpop.f32.mrb[0].mxu0
        %v1000 = vadd.f32 0.0, %v999
        %v1001 = vpop.f32.mrb[0].mxu0
        %1002 = vdwg.mxu0
        %v1003 = vsel %vm613, %v997, -inf
        %1004 = vmax.xlane.f32.xlu0 %v1003
        %v1005 = vpop.xlane.xlu0 %1004
        %v1006 = vsel %vm613, %v1000, -inf
        %1007 = vmax.xlane.f32.xlu0 %v1006
        %v1008 = vpop.xlane.xlu0 %1007
        %v1009 = vsub.f32 %v997, %v1005
        %v1010 = vsub.f32 %v1000, %v1008
        %v1011 = vmul.f32 %v1009, 1.442695
        %v1012 = vpow.pop %v1011
        %v1013 = vmul.f32 %v1010, 1.442695
        %v1014 = vpow.pop %v1013
        %v1015 = vsel %vm613, %v1012, 0.0
        %1016 = vadd.xlane.f32.xlu0 %v1015
        %v1017 = vpop.xlane.xlu0 %1016
        %v1018 = vsel %vm613, %v1014, 0.0
        %1019 = vadd.xlane.f32.xlu0 %v1018
        %v1020 = vpop.xlane.xlu0 %1019
        %v1021 = vrcp.pop %v1017
        %v1022 = vrcp.pop %v1020
        %v1023 = vmul.f32 %v1012, %v1021
        %v1024 = vmul.f32 %v1014, %v1022
        %v1025 = vpack.c.bf16 %v1024, %v1023
        %1026 = vrot.lane.b32.xlu0 %v564, 72
        %v1027 = vpop.permute.xlu0 %1026
        %v1030 = vsel %vm613, %v1025, 0
        %1032 = vmatprep.subr.bf16.mxu0 0
        %1033 = vmatpush1.bf16.msra.mxu0 %v1027
        %1034 = vmatprep.subr.bf16.mxu0 0
        %1035 = vmatpush1.bf16.msra.mxu0 0
        %1036 = vmatprep.subr.bf16.mxu0 0
        %1037 = vmatpush1.bf16.msra.mxu0 0
        %1038 = vmatprep.subr.bf16.mxu0 0
        %1039 = vmatpush1.bf16.msra.mxu0 0
        %1040 = vmatprep.subr.bf16.mxu0 0
        %1041 = vmatpush1.bf16.msra.mxu0 0
        %1042 = vmatprep.subr.bf16.mxu0 0
        %1043 = vmatpush1.bf16.msra.mxu0 0
        %1044 = vmatprep.subr.bf16.mxu0 0
        %1045 = vmatpush1.bf16.msra.mxu0 0
        %1046 = vmatprep.subr.bf16.mxu0 0
        %1047 = vmatpush1.bf16.msra.mxu0 0
        %1048 = vmatprep.subr.bf16.mxu0 0
        %1049 = vmatpush1.bf16.msra.mxu0 0
        %1050 = vmatprep.subr.bf16.mxu0 0
        %1051 = vmatpush1.bf16.msra.mxu0 0
        %1052 = vmatprep.subr.bf16.mxu0 0
        %1053 = vmatpush1.bf16.msra.mxu0 0
        %1054 = vmatprep.subr.bf16.mxu0 0
        %1055 = vmatpush1.bf16.msra.mxu0 0
        %1056 = vmatprep.subr.bf16.mxu0 0
        %1057 = vmatpush1.bf16.msra.mxu0 0
        %1058 = vmatprep.subr.bf16.mxu0 0
        %1059 = vmatpush1.bf16.msra.mxu0 0
        %1060 = vmatprep.subr.bf16.mxu0 0
        %1061 = vmatpush1.bf16.msra.mxu0 0
        %1062 = vmatprep.subr.bf16.mxu0 0
        %1063 = vmatpush1.bf16.msra.mxu0 0
        %1064 = vmatprep.mubr.bf16.mxu0 0
        %1065 = vmatmul.mubr.bf16.gmra.mrb[0].mxu0 %v1030
        %v1066 = vpop.f32.mrb[0].mxu0
        %v1067 = vadd.f32 0.0, %v1066
        %v1068 = vpop.f32.mrb[0].mxu0
        %v1069 = vpop.f32.mrb[0].mxu0
        %v1070 = vadd.f32 0.0, %v1069
        %v1071 = vpop.f32.mrb[0].mxu0
        %1072 = vdwg.mxu0
        %1075 = vrot.lane.b32.xlu0 %v1067, 24
        %v1076 = vpop.permute.xlu0 %1075
        %1077 = vrot.lane.b32.xlu0 %v1070, 24
        %v1078 = vpop.permute.xlu0 %1077
        %vm1081 = vcmask 261312
        %1082 = vst.msk [vmem:[#allocation3] sm:$0xff] %vm1081, %v1076
        %1083 = vst.msk [vmem:[#allocation3 + $0x8] sm:$0xff] %vm1081, %v1078
        %v1084 = vld [vmem:[#allocation3] sm:$0xff]
        %v1085 = vld [vmem:[#allocation3 + $0x8] sm:$0xff]
        %v1086 = vpack.c.bf16 %v1085, %v1084
        %v1087 = vld [vmem:[%s6] sm:$0xf]
        %v1088 = vld [vmem:[%s6 + $0x4] sm:$0xf]
        %v1089 = vld [vmem:[%s6 + $0x8] sm:$0xf]
        %v1090 = vld [vmem:[%s6 + $0xc] sm:$0xf]
        %v1091 = vld [vmem:[%s7] sm:$0x1]
        %v1093 = vlaneseq
        %v1094 = vshrl.u32 %v1093, 7
        %v1095 = vsub.s32 0, %v1094
        %v1096 = vrot.slane %v1091, %v1095
        %v1102 = vunpack.c.l.b16 %v1087
        %v1103 = vunpack.c.l.b16 %v1088
        %v1104 = vunpack.c.l.b16 %v1089
        %v1105 = vunpack.c.l.b16 %v1090
        %v1106 = vpack.c.b16 %v1103, %v1102
        %v1107 = vpack.c.b16 %v1105, %v1104
        %v1111 = vsel %vm518, %v1086, 0
        %1113 = vmatprep.subr.bf16.mxu0 0
        %1114 = vmatpush1.bf16.msra.mxu0 %v1106
        %1115 = vmatprep.subr.bf16.mxu0 0
        %1116 = vmatpush1.bf16.msra.mxu0 %v1107
        %1117 = vmatprep.subr.bf16.mxu0 0
        %1118 = vmatpush1.bf16.msra.mxu0 0
        %1119 = vmatprep.subr.bf16.mxu0 0
        %1120 = vmatpush1.bf16.msra.mxu0 0
        %1121 = vmatprep.subr.bf16.mxu0 0
        %1122 = vmatpush1.bf16.msra.mxu0 0
        %1123 = vmatprep.subr.bf16.mxu0 0
        %1124 = vmatpush1.bf16.msra.mxu0 0
        %1125 = vmatprep.subr.bf16.mxu0 0
        %1126 = vmatpush1.bf16.msra.mxu0 0
        %1127 = vmatprep.subr.bf16.mxu0 0
        %1128 = vmatpush1.bf16.msra.mxu0 0
        %1129 = vmatprep.subr.bf16.mxu0 0
        %1130 = vmatpush1.bf16.msra.mxu0 0
        %1131 = vmatprep.subr.bf16.mxu0 0
        %1132 = vmatpush1.bf16.msra.mxu0 0
        %1133 = vmatprep.subr.bf16.mxu0 0
        %1134 = vmatpush1.bf16.msra.mxu0 0
        %1135 = vmatprep.subr.bf16.mxu0 0
        %1136 = vmatpush1.bf16.msra.mxu0 0
        %1137 = vmatprep.subr.bf16.mxu0 0
        %1138 = vmatpush1.bf16.msra.mxu0 0
        %1139 = vmatprep.subr.bf16.mxu0 0
        %1140 = vmatpush1.bf16.msra.mxu0 0
        %1141 = vmatprep.subr.bf16.mxu0 0
        %1142 = vmatpush1.bf16.msra.mxu0 0
        %1143 = vmatprep.subr.bf16.mxu0 0
        %1144 = vmatpush1.bf16.msra.mxu0 0
        %1145 = vmatprep.mubr.bf16.mxu0 0
        %1146 = vmatmul.mubr.bf16.gmra.mrb[0].mxu0 %v1111
        %v1147 = vpop.f32.mrb[0].mxu0
        %v1148 = vadd.f32 %v1096, %v1147
        %v1149 = vpop.f32.mrb[0].mxu0
        %v1150 = vpop.f32.mrb[0].mxu0
        %v1151 = vadd.f32 %v1096, %v1150
        %v1152 = vpop.f32.mrb[0].mxu0
        %1153 = vdwg.mxu0
        %1154 = vst.msk [vmem:[%s410] sm:$0xff] %vm518, %v1148
        %1155 = vst.msk [vmem:[%s410 + $0x8] sm:$0xff] %vm518, %v1151
        %s1156 = sand.u32 %s231, 1
        %s1157 = scalar_lea.sflag [#allocation6], %s1156
        %s1158 = sand.u32 %s231, 1
        %s1159 = smul.addr %s1158, 16
        %s1160 = scalar_lea.vmem [#allocation12], %s1159
        // Predicated region
        $region73: #{tpu_custom_call.1} parent=51 // pred_check
          %p1161 = pneg %p241
        $region74: #{tpu_custom_call.1} parent=51 // pred_check_branch
          %1163 = sbr.rel (%p1161) target = $region76
        $region75: #{tpu_custom_call.1} parent=51 // pred_region
          %s1164 = smul.u32 2, %s34
          %s1166 = ssub.s32 256, 256
          %1167 = vsyncadd %s1157, %s1166
          %s1168 = smul.addr %s33, 2
          %s1169 = sadd.s32 %s1164, %s1168
          %s1170 = smul.addr %s1169, 128
          %s1171 = scalar_lea.hbm %s8, %s1170
          %s1172 = sshll.u32 %s1160, 4
          %s1173 = int_to_ptr.vmem [resolvable:$true] %s1172
          %1178 = dma.vmem_to_hbm [thread:$0]  %s1173, 256, %s1171, %s1157, 128, 128, 8
        $region76: #{tpu_custom_call.1} parent=51 // pred_fallthru
          _
      $region52: #{tpu_custom_call.1} parent=5 // pred_fallthru
        _
      %p1179 = scmp.le.s32.totalorder 2, %s24
      // Predicated region
      $region77: #{tpu_custom_call.1} parent=5 // pred_check
        %p1180 = pneg %p1179
      $region78: #{tpu_custom_call.1} parent=5 // pred_check_branch
        %1182 = sbr.rel (%p1180) target = $region80
      $region79: #{tpu_custom_call.1} parent=5 // pred_region
        %s1183 = ssub.s32 %s24, 2
        // Predicated region
        $region81: #{tpu_custom_call.1} parent=79 // pred_check
          %p1184 = pneg %p247
        $region82: #{tpu_custom_call.1} parent=79 // pred_check_branch
          %1186 = sbr.rel (%p1184) target = $region84
        $region83: #{tpu_custom_call.1} parent=79 // pred_region
          %s1187 = sand.u32 %s232, 1
          %s1188 = scalar_lea.sflag [#allocation6], %s1187
          %s1189 = sand.u32 %s232, 1
          %s1190 = smul.addr %s1189, 16
          %s1191 = scalar_lea.vmem [#allocation12], %s1190
          %1192 = dma.done %s1188, 256
        $region84: #{tpu_custom_call.1} parent=79 // pred_fallthru
          _
      $region80: #{tpu_custom_call.1} parent=5 // pred_fallthru
        _
    $region6: #{tpu_custom_call.1} parent=1 // loop_footer
      %s28 = sadd.s32 1, %s24
    $region7: #{tpu_custom_call.1} parent=1 // loop_footer_branch
      %23 = sbr.rel target = $region3
    $region8: #{tpu_custom_call.1} parent=1 // loop_exit
      _
    %1193 = vsyncpa [#allocation5], 1
    %s1194 = scalar_lea.sflag [#allocation5], 1
    %1195 = vsyncpa %s1194, 1
    %1196 = vsyncpa [#allocation8], 1
    %s1197 = scalar_lea.sflag [#allocation8], 1
    %1198 = vsyncpa %s1197, 1
    %1199 = vsyncpa [#allocation11], 1
    %1200 = vsyncpa [#allocation6], 1
    %s1201 = scalar_lea.sflag [#allocation6], 1
    %1202 = vsyncpa %s1201, 1

</llo_original>
